<compile_context>
chip_gen: v7x
topology: tpu7x:2x2x1
jax: 0.10.0
libtpu: 0.0.40
codegen_flags: <defaults>
</compile_context>

<pallas_src>
import jax
import jax.numpy as jnp
from jax.experimental import pallas as pl
from jax.experimental.pallas import tpu as pltpu

EMBED_DIM = 32
HALF_DIM = EMBED_DIM // 2
NUM_ITEMS = 30
NUM_LAYERS = 3
RATIO = 0.8        # TopKPooling ratio (python float -> literal inside kernel)
BIG = 1e30         # additive-mask magnitude

# ---- packed-slab row offsets (8-sublane aligned) --------------------------------------
# layer pack: [NUM_LAYERS, LP_ROWS, 2*EMBED_DIM]
LP_R_WLWS = 0                        # rows 0:D      -> [wl | wus]   ([D, 2D])
LP_R_WUA = EMBED_DIM                 # rows D:2D     -> wua          ([D, D] in cols 0:D)
LP_R_BL = 2 * EMBED_DIM              # row 2D        -> bl           ([1, D])
LP_R_PROW = 2 * EMBED_DIM + 8        # row 2D+8      -> p/||p||      ([1, D])
LP_ROWS = 2 * EMBED_DIM + 16
# head pack: [HP_ROWS, EMBED_DIM]
HP_R_W1 = 0                          # rows 0:2D     -> w1           ([2D, D])
HP_R_B1 = 2 * EMBED_DIM              # row 2D        -> b1           ([1, D])
HP_R_W2 = 2 * EMBED_DIM + 8          # rows ..:..+D  -> w2           ([D, D/2] in cols 0:D/2)
HP_R_B2 = HP_R_W2 + EMBED_DIM        # row           -> b2           ([1, D/2])
HP_R_W3 = HP_R_B2 + 8                # row           -> w3^T         ([1, D/2])
HP_R_B3 = HP_R_W3 + 8                # row           -> b3           ([1, 1])
HP_ROWS = HP_R_B3 + 8


# ------------------------------------ fused kernel ------------------------------------ #

def net_kernel(x0_ref, struct_ref, lp_ref, hp_ref, gg_ref, prob_ref):
    # x0:[N,D]  struct:[N+1,N] (adj rows + batch-id row)  lp:[L,LP_ROWS,2D]  hp:[HP_ROWS,D]
    # outputs: gg:[B,2D] = [sum_l gmp_l | sum_l gap_l],  prob:[B,1]
    N, D = x0_ref.shape
    B = gg_ref.shape[0]
    H = D // 2

    x = x0_ref[...]
    adj = struct_ref[0:N, :]                               # [N,N]  A[i,j]=1 <=> edge j->i
    batch_row = struct_ref[N:N + 1, :]                     # [1,N]  graph id per node (f32)

    # constants built once (no DMA): identity/tie masks, same-graph & membership matrices
    row_i = jax.lax.broadcasted_iota(jnp.int32, (N, N), 0)
    col_i = jax.lax.broadcasted_iota(jnp.int32, (N, N), 1)
    eye = (row_i == col_i).astype(jnp.float32)             # self-loop diag / [N,1]<->[1,N] transposer
    tie = col_i < row_i                                    # tie-break: lower index wins
    batch_col = jnp.sum(batch_row * eye, axis=1, keepdims=True)                   # [N,1]
    same = (batch_col == batch_row).astype(jnp.float32)                           # [N,N]
    iota_nb = jax.lax.broadcasted_iota(jnp.int32, (N, B), 1).astype(jnp.float32)
    onehot_nb = (batch_col == iota_nb).astype(jnp.float32)                        # [N,B]
    iota_bn = jax.lax.broadcasted_iota(jnp.int32, (B, N), 0).astype(jnp.float32)
    onehot_bn = (iota_bn == batch_row).astype(jnp.float32)                        # [B,N]
    row_bd = jax.lax.broadcasted_iota(jnp.int32, (B, D), 0)                       # graph-row selector

    active_col = jnp.ones((N, 1), jnp.float32)
    active_row = jnp.ones((1, N), jnp.float32)
    gmp_tot = jnp.zeros((B, D), jnp.float32)
    gap_tot = jnp.zeros((B, D), jnp.float32)

    for l in range(NUM_LAYERS):
        pk = lp_ref[l]                                      # [LP_ROWS, 2D] (one VMEM load)
        w_lws = pk[LP_R_WLWS:LP_R_WLWS + D, :]              # [D, 2D] = [wl | wus]
        wua = pk[LP_R_WUA:LP_R_WUA + D, 0:D]                # [D, D]
        bl = pk[LP_R_BL:LP_R_BL + 1, 0:D]                   # [1, D]
        prow = pk[LP_R_PROW:LP_R_PROW + 1, 0:D]             # [1, D]  (pre-normalized)

        # ---------------- SAGEConv (aggr='max', forced self-loops) --------------------
        # fused matmul: x @ [wl | wus]  ->  message half + update half
        z = jnp.dot(x, w_lws, preferred_element_type=jnp.float32)      # [N, 2D]
        m = jnp.maximum(z[:, 0:D] + bl, 0.0)                           # relu(lin(x_j))
        xs = z[:, D:2 * D]                                             # x @ wus

        # masked max-aggregation over sources (hoisted additive mask, running 2-D max)
        neg = (jnp.maximum(adj, eye) - 1.0) * BIG                      # [N,N], once per layer
        aggr = m[0:1, :] + neg[:, 0:1]
        for j in range(1, N):
            aggr = jnp.maximum(aggr, m[j:j + 1, :] + neg[:, j:j + 1])

        # update: relu(cat([aggr, x]) @ Wu) == relu(aggr @ Wu[:D] + x @ Wu[D:])
        x = jnp.maximum(
            jnp.dot(aggr, wua, preferred_element_type=jnp.float32) + xs, 0.0)

        # ---------------- TopKPooling (mask formulation) ------------------------------
        raw_col = jnp.sum(x * prow, axis=1, keepdims=True)             # [N,1] score = x.p/||p||
        raw_row = jnp.sum(raw_col * eye, axis=0, keepdims=True)        # [1,N] bit-exact transpose
        better = ((raw_row > raw_col)
                  | ((raw_row == raw_col) & tie)).astype(jnp.float32)  # j beats i
        rank_col = jnp.sum(same * active_row * better, axis=1, keepdims=True)   # [N,1]

        cnt_b = jnp.sum(onehot_nb * active_col, axis=0, keepdims=True)  # [1,B] active per graph
        k_b = jnp.ceil(RATIO * cnt_b)                                    # [1,B]
        kof_col = jnp.sum(onehot_nb * k_b, axis=1, keepdims=True)        # [N,1]

        keep_col = active_col * (rank_col < kof_col).astype(jnp.float32)
        keep_row = jnp.sum(keep_col * eye, axis=0, keepdims=True)

        x = x * jnp.tanh(raw_col) * keep_col    # gate kept nodes; dropped nodes are zeroed
        adj = adj * keep_col * keep_row
        active_col = keep_col
        active_row = keep_row

        # ---------------- readout: gap via one MXU op, gmp via tiny per-graph loop ----
        memb_bn = onehot_bn * active_row                                 # [B,N]
        cnt = jnp.sum(memb_bn, axis=1, keepdims=True)                    # [B,1]
        gap_tot = gap_tot + (jnp.dot(memb_bn, x, preferred_element_type=jnp.float32)
                             / jnp.maximum(cnt, 1.0))
        memb_nb = onehot_nb * active_col                                 # [N,B]
        for b in range(B):
            mcol = memb_nb[:, b:b + 1]                                   # [N,1]
            gmp_b = jnp.max(x + (mcol - 1.0) * BIG, axis=0, keepdims=True)   # [1,D]
            gmp_b = jnp.where(cnt[b:b + 1, :] > 0.0, gmp_b, 0.0)         # empty-graph guard
            gmp_tot = gmp_tot + jnp.where(row_bd == b, gmp_b, 0.0)

    # single [B, 2D] readout output ([gmp | gap]); reused directly by the fused lin1
    gg_ref[:, 0:D] = gmp_tot
    gg_ref[:, D:2 * D] = gap_tot
    embed = gg_ref[...]

    # ---------------- MLP head (lin1-relu-lin2-relu-lin3-sigmoid) ----------------------
    w1 = hp_ref[HP_R_W1:HP_R_W1 + 2 * D, :]            # [2D, D]
    b1 = hp_ref[HP_R_B1:HP_R_B1 + 1, :]                # [1, D]
    w2 = hp_ref[HP_R_W2:HP_R_W2 + D, 0:H]              # [D, H]
    b2 = hp_ref[HP_R_B2:HP_R_B2 + 1, 0:H]              # [1, H]
    w3r = hp_ref[HP_R_W3:HP_R_W3 + 1, 0:H]             # [1, H]
    b3 = hp_ref[HP_R_B3:HP_R_B3 + 1, 0:1]              # [1, 1]

    h1 = jnp.maximum(jnp.dot(embed, w1, preferred_element_type=jnp.float32) + b1, 0.0)
    h2 = jnp.maximum(jnp.dot(h1, w2, preferred_element_type=jnp.float32) + b2, 0.0)
    # TODO(synk): F.dropout(p=0.5, training=True) is stochastic; implemented as eval-mode identity.
    logit = jnp.sum(h2 * w3r, axis=1, keepdims=True) + b3
    prob_ref[...] = jax.nn.sigmoid(logit)


# ------------------------------------- JAX glue ---------------------------------------- #

def _vmem():
    return pl.BlockSpec(memory_space=pltpu.MemorySpace.VMEM)


def pack_params(params):
    """One-time packing of all weights into two slabs (2 DMAs instead of ~13)."""
    d, h = EMBED_DIM, HALF_DIM
    layer_packs = []
    for l in range(NUM_LAYERS):
        wl, bl, wu = params["conv"][l]                      # [D,D], [1,D], [2D,D]
        p = params["pool"][l]                               # [1,D]
        prow = p / jnp.sqrt(jnp.sum(p * p, axis=-1, keepdims=True))
        pk = jnp.zeros((LP_ROWS, 2 * d), jnp.float32)
        pk = pk.at[LP_R_WLWS:LP_R_WLWS + d, :].set(jnp.concatenate([wl, wu[d:]], axis=1))
        pk = pk.at[LP_R_WUA:LP_R_WUA + d, 0:d].set(wu[:d])
        pk = pk.at[LP_R_BL, 0:d].set(bl[0])
        pk = pk.at[LP_R_PROW, 0:d].set(prow[0])
        layer_packs.append(pk)
    layer_pack = jnp.stack(layer_packs)                     # [L, LP_ROWS, 2D]

    w1, b1, w2, b2, w3, b3 = params["head"]
    hp = jnp.zeros((HP_ROWS, d), jnp.float32)
    hp = hp.at[HP_R_W1:HP_R_W1 + 2 * d, :].set(w1)
    hp = hp.at[HP_R_B1, :].set(b1[0])
    hp = hp.at[HP_R_W2:HP_R_W2 + d, 0:h].set(w2)
    hp = hp.at[HP_R_B2, 0:h].set(b2[0])
    hp = hp.at[HP_R_W3, 0:h].set(w3[:, 0])
    hp = hp.at[HP_R_B3, 0].set(b3[0, 0])
    return {"emb": params["emb"], "layer_pack": layer_pack, "head_pack": hp}


def net_forward(packed, item_ids, edge_index, batch, num_graphs):
    n = item_ids.shape[0]
    d = EMBED_DIM

    # item_embedding(x).squeeze(1)  (XLA gather, outside the kernel)
    x0 = packed["emb"][item_ids.reshape(-1)].astype(jnp.float32)          # [N, D]

    # dense adjacency via one-hot matmul (no TPU scatter): A[i,j]=1 <=> edge j->i
    src, dst = edge_index[0], edge_index[1]
    iota_n = jnp.arange(n, dtype=src.dtype)
    src_oh = (src[:, None] == iota_n[None, :]).astype(jnp.float32)        # [E, N]
    dst_oh = (dst[:, None] == iota_n[None, :]).astype(jnp.float32)        # [E, N]
    adj = jnp.minimum(jnp.dot(dst_oh.T, src_oh), 1.0)                     # [N, N]

    # graph-structure slab: adjacency rows + one batch-id row (same / one-hots built in-kernel)
    struct = jnp.concatenate([adj, batch.astype(jnp.float32)[None, :]], axis=0)   # [N+1, N]

    out_shape = (
        jax.ShapeDtypeStruct((num_graphs, 2 * d), jnp.float32),   # [gmp | gap] summed over layers
        jax.ShapeDtypeStruct((num_graphs, 1), jnp.float32),       # sigmoid(lin3)
    )
    # TODO(synk): for throughput over many mini-batches, add a leading "parallel" grid axis
    # over batches (uses both v7x TensorCores); this script runs a single tiny batch.
    embed, probs = pl.pallas_call(
        net_kernel,
        out_shape=out_shape,
        in_specs=[_vmem(), _vmem(), _vmem(), _vmem()],
        out_specs=(_vmem(), _vmem()),
    )(x0, struct, packed["layer_pack"], packed["head_pack"])

    return probs[:, 0], embed                                             # (x, embed.squeeze())


# ------------------------------------ parameters --------------------------------------- #

def init_params(key):
    keys = jax.random.split(key, 20)

    def linear(k, fan_in, fan_out, bias=True):
        kw, kb = jax.random.split(k)
        bound = 1.0 / (fan_in ** 0.5)
        w = jax.random.uniform(kw, (fan_in, fan_out), jnp.float32, -bound, bound)
        b = (jax.random.uniform(kb, (1, fan_out), jnp.float32, -bound, bound)
             if bias else None)
        return w, b

    params = {"emb": jax.random.normal(keys[0], (NUM_ITEMS + 1, EMBED_DIM), jnp.float32)}
    convs, pools = [], []
    for i in range(NUM_LAYERS):
        wl, bl = linear(keys[1 + 2 * i], EMBED_DIM, EMBED_DIM)                   # lin
        wu, _ = linear(keys[2 + 2 * i], 2 * EMBED_DIM, EMBED_DIM, bias=False)    # update_lin (no bias)
        convs.append((wl, bl, wu))
        pools.append(jax.random.normal(keys[10 + i], (1, EMBED_DIM), jnp.float32))
    params["conv"] = convs
    params["pool"] = pools
    w1, b1 = linear(keys[13], 2 * EMBED_DIM, EMBED_DIM)
    w2, b2 = linear(keys[14], EMBED_DIM, EMBED_DIM // 2)
    w3, b3 = linear(keys[15], EMBED_DIM // 2, 1)
    params["head"] = (w1, b1, w2, b2, w3, b3)
    return params


# --------------------------------------- main ------------------------------------------ #

if __name__ == "__main__":
    key = jax.random.PRNGKey(0)
    pkey, ikey = jax.random.split(key)
    params = init_params(pkey)
    packed = pack_params(params)    # one-time weight packing (outside the jitted forward)

    # two small graphs: graph 0 = chain over nodes 0..4, graph 1 = cycle over nodes 5..7
    N = 8
    item_ids = jax.random.randint(ikey, (N, 1), 0, NUM_ITEMS + 1, dtype=jnp.int32)
    undirected = [(0, 1), (1, 2), (2, 3), (3, 4), (5, 6), (6, 7), (7, 5)]
    src, dst = [], []
    for a, b in undirected:
        src += [a, b]
        dst += [b, a]
    edge_index = jnp.array([src, dst], dtype=jnp.int32)                   # [2, 14]
    batch = jnp.array([0, 0, 0, 0, 0, 1, 1, 1], dtype=jnp.int32)
    num_graphs = 2

    fwd = jax.jit(net_forward, static_argnums=(4,))
    probs, embed = fwd(packed, item_ids, edge_index, batch, num_graphs)
    jax.block_until_ready((probs, embed))
    assert probs.shape == (num_graphs,)
    assert embed.shape == (num_graphs, 2 * EMBED_DIM)
    assert bool(jnp.all(jnp.isfinite(probs))) and bool(jnp.all(jnp.isfinite(embed)))
    print("KERNEL_OK")
</pallas_src>

<mosaic_0001>
module attributes {stable_mosaic.version = 11 : i64} {
  func.func @net_kernel(%arg0: memref<8x32xf32, #tpu.memory_space<vmem>>, %arg1: memref<9x8xf32, #tpu.memory_space<vmem>>, %arg2: memref<3x80x64xf32, #tpu.memory_space<vmem>>, %arg3: memref<128x32xf32, #tpu.memory_space<vmem>>, %arg4: memref<2x64xf32, #tpu.memory_space<vmem>>, %arg5: memref<2x1xf32, #tpu.memory_space<vmem>>) attributes {dimension_semantics = [], scalar_prefetch = 0 : i64, scratch_operands = 0 : i64, tpu.core_type = #tpu.core_type<tc>} {
    %c0 = arith.constant 0 : index
    %c0_0 = arith.constant 0 : index
    %0 = vector.load %arg0[%c0, %c0_0] : memref<8x32xf32, #tpu.memory_space<vmem>>, vector<8x32xf32>
    %c0_1 = arith.constant 0 : index
    %c0_2 = arith.constant 0 : index
    %1 = vector.load %arg1[%c0_1, %c0_2] : memref<9x8xf32, #tpu.memory_space<vmem>>, vector<8x8xf32>
    %c8 = arith.constant 8 : index
    %c0_3 = arith.constant 0 : index
    %2 = vector.load %arg1[%c8, %c0_3] : memref<9x8xf32, #tpu.memory_space<vmem>>, vector<1x8xf32>
    %3 = tpu.iota {dimensions = array<i32: 0>} : vector<8x8xi32>
    %4 = tpu.iota {dimensions = array<i32: 1>} : vector<8x8xi32>
    %5 = arith.cmpi eq, %3, %4 : vector<8x8xi32>
    %6 = arith.extui %5 : vector<8x8xi1> to vector<8x8xi32>
    %7 = arith.sitofp %6 : vector<8x8xi32> to vector<8x8xf32>
    %8 = arith.cmpi slt, %4, %3 : vector<8x8xi32>
    %9 = vector.broadcast %2 : vector<1x8xf32> to vector<8x8xf32>
    %10 = arith.mulf %9, %7 : vector<8x8xf32>
    %cst = arith.constant dense<0.000000e+00> : vector<8xf32>
    %11 = vector.multi_reduction <add>, %10, %cst [1] : vector<8x8xf32> to vector<8xf32>
    %12 = vector.shape_cast %11 : vector<8xf32> to vector<8x1xf32>
    %13 = vector.broadcast %12 : vector<8x1xf32> to vector<8x8xf32>
    %14 = vector.broadcast %2 : vector<1x8xf32> to vector<8x8xf32>
    %15 = arith.cmpf oeq, %13, %14 : vector<8x8xf32>
    %16 = arith.extui %15 : vector<8x8xi1> to vector<8x8xi32>
    %17 = arith.sitofp %16 : vector<8x8xi32> to vector<8x8xf32>
    %18 = tpu.iota {dimensions = array<i32: 1>} : vector<8x2xi32>
    %19 = arith.sitofp %18 : vector<8x2xi32> to vector<8x2xf32>
    %20 = vector.broadcast %12 : vector<8x1xf32> to vector<8x2xf32>
    %21 = arith.cmpf oeq, %20, %19 : vector<8x2xf32>
    %22 = arith.extui %21 : vector<8x2xi1> to vector<8x2xi32>
    %23 = arith.sitofp %22 : vector<8x2xi32> to vector<8x2xf32>
    %24 = tpu.iota {dimensions = array<i32: 0>} : vector<2x8xi32>
    %25 = arith.sitofp %24 : vector<2x8xi32> to vector<2x8xf32>
    %26 = vector.broadcast %2 : vector<1x8xf32> to vector<2x8xf32>
    %27 = arith.cmpf oeq, %25, %26 : vector<2x8xf32>
    %28 = arith.extui %27 : vector<2x8xi1> to vector<2x8xi32>
    %29 = arith.sitofp %28 : vector<2x8xi32> to vector<2x8xf32>
    %30 = tpu.iota {dimensions = array<i32: 0>} : vector<2x32xi32>
    %cst_4 = arith.constant 1.000000e+00 : f32
    %31 = vector.broadcast %cst_4 : f32 to vector<8x1xf32>
    %cst_5 = arith.constant 1.000000e+00 : f32
    %32 = vector.broadcast %cst_5 : f32 to vector<1x8xf32>
    %cst_6 = arith.constant 0.000000e+00 : f32
    %33 = vector.broadcast %cst_6 : f32 to vector<2x32xf32>
    %cst_7 = arith.constant 0.000000e+00 : f32
    %34 = vector.broadcast %cst_7 : f32 to vector<2x32xf32>
    %c0_8 = arith.constant 0 : index
    %c0_9 = arith.constant 0 : index
    %c0_10 = arith.constant 0 : index
    %35 = vector.load %arg2[%c0_8, %c0_9, %c0_10] : memref<3x80x64xf32, #tpu.memory_space<vmem>>, vector<1x80x64xf32>
    %36 = vector.shape_cast %35 : vector<1x80x64xf32> to vector<80x64xf32>
    %37 = vector.extract_strided_slice %36 {offsets = [0, 0], sizes = [32, 64], strides = [1, 1]} : vector<80x64xf32> to vector<32x64xf32>
    %38 = vector.extract_strided_slice %36 {offsets = [32, 0], sizes = [32, 32], strides = [1, 1]} : vector<80x64xf32> to vector<32x32xf32>
    %39 = vector.extract_strided_slice %36 {offsets = [64, 0], sizes = [1, 32], strides = [1, 1]} : vector<80x64xf32> to vector<1x32xf32>
    %40 = vector.extract_strided_slice %36 {offsets = [72, 0], sizes = [1, 32], strides = [1, 1]} : vector<80x64xf32> to vector<1x32xf32>
    %cst_11 = arith.constant dense<0.000000e+00> : vector<8x64xf32>
    %41 = tpu.matmul %0, %37, %cst_11 {dimension_numbers = #tpu.dot_dimension_numbers<[1], [0], [0], [1], [0, 0, 1, 1], [], []>} : vector<8x32xf32>, vector<32x64xf32>, vector<8x64xf32> -> vector<8x64xf32>
    %42 = vector.extract_strided_slice %41 {offsets = [0, 0], sizes = [8, 32], strides = [1, 1]} : vector<8x64xf32> to vector<8x32xf32>
    %43 = vector.broadcast %39 : vector<1x32xf32> to vector<8x32xf32>
    %44 = arith.addf %42, %43 : vector<8x32xf32>
    %cst_12 = arith.constant 0.000000e+00 : f32
    %45 = vector.broadcast %cst_12 : f32 to vector<8x32xf32>
    %46 = arith.maximumf %44, %45 : vector<8x32xf32>
    %47 = vector.extract_strided_slice %41 {offsets = [0, 32], sizes = [8, 32], strides = [1, 1]} : vector<8x64xf32> to vector<8x32xf32>
    %48 = arith.maximumf %1, %7 : vector<8x8xf32>
    %cst_13 = arith.constant 1.000000e+00 : f32
    %49 = vector.broadcast %cst_13 : f32 to vector<8x8xf32>
    %50 = arith.subf %48, %49 : vector<8x8xf32>
    %cst_14 = arith.constant 1.000000e+30 : f32
    %51 = vector.broadcast %cst_14 : f32 to vector<8x8xf32>
    %52 = arith.mulf %50, %51 : vector<8x8xf32>
    %53 = vector.extract_strided_slice %46 {offsets = [0, 0], sizes = [1, 32], strides = [1, 1]} : vector<8x32xf32> to vector<1x32xf32>
    %54 = vector.extract_strided_slice %52 {offsets = [0, 0], sizes = [8, 1], strides = [1, 1]} : vector<8x8xf32> to vector<8x1xf32>
    %55 = vector.broadcast %53 : vector<1x32xf32> to vector<8x32xf32>
    %56 = vector.broadcast %54 : vector<8x1xf32> to vector<8x32xf32>
    %57 = arith.addf %55, %56 : vector<8x32xf32>
    %58 = vector.extract_strided_slice %46 {offsets = [1, 0], sizes = [1, 32], strides = [1, 1]} : vector<8x32xf32> to vector<1x32xf32>
    %59 = vector.extract_strided_slice %52 {offsets = [0, 1], sizes = [8, 1], strides = [1, 1]} : vector<8x8xf32> to vector<8x1xf32>
    %60 = vector.broadcast %58 : vector<1x32xf32> to vector<8x32xf32>
    %61 = vector.broadcast %59 : vector<8x1xf32> to vector<8x32xf32>
    %62 = arith.addf %60, %61 : vector<8x32xf32>
    %63 = arith.maximumf %57, %62 : vector<8x32xf32>
    %64 = vector.extract_strided_slice %46 {offsets = [2, 0], sizes = [1, 32], strides = [1, 1]} : vector<8x32xf32> to vector<1x32xf32>
    %65 = vector.extract_strided_slice %52 {offsets = [0, 2], sizes = [8, 1], strides = [1, 1]} : vector<8x8xf32> to vector<8x1xf32>
    %66 = vector.broadcast %64 : vector<1x32xf32> to vector<8x32xf32>
    %67 = vector.broadcast %65 : vector<8x1xf32> to vector<8x32xf32>
    %68 = arith.addf %66, %67 : vector<8x32xf32>
    %69 = arith.maximumf %63, %68 : vector<8x32xf32>
    %70 = vector.extract_strided_slice %46 {offsets = [3, 0], sizes = [1, 32], strides = [1, 1]} : vector<8x32xf32> to vector<1x32xf32>
    %71 = vector.extract_strided_slice %52 {offsets = [0, 3], sizes = [8, 1], strides = [1, 1]} : vector<8x8xf32> to vector<8x1xf32>
    %72 = vector.broadcast %70 : vector<1x32xf32> to vector<8x32xf32>
    %73 = vector.broadcast %71 : vector<8x1xf32> to vector<8x32xf32>
    %74 = arith.addf %72, %73 : vector<8x32xf32>
    %75 = arith.maximumf %69, %74 : vector<8x32xf32>
    %76 = vector.extract_strided_slice %46 {offsets = [4, 0], sizes = [1, 32], strides = [1, 1]} : vector<8x32xf32> to vector<1x32xf32>
    %77 = vector.extract_strided_slice %52 {offsets = [0, 4], sizes = [8, 1], strides = [1, 1]} : vector<8x8xf32> to vector<8x1xf32>
    %78 = vector.broadcast %76 : vector<1x32xf32> to vector<8x32xf32>
    %79 = vector.broadcast %77 : vector<8x1xf32> to vector<8x32xf32>
    %80 = arith.addf %78, %79 : vector<8x32xf32>
    %81 = arith.maximumf %75, %80 : vector<8x32xf32>
    %82 = vector.extract_strided_slice %46 {offsets = [5, 0], sizes = [1, 32], strides = [1, 1]} : vector<8x32xf32> to vector<1x32xf32>
    %83 = vector.extract_strided_slice %52 {offsets = [0, 5], sizes = [8, 1], strides = [1, 1]} : vector<8x8xf32> to vector<8x1xf32>
    %84 = vector.broadcast %82 : vector<1x32xf32> to vector<8x32xf32>
    %85 = vector.broadcast %83 : vector<8x1xf32> to vector<8x32xf32>
    %86 = arith.addf %84, %85 : vector<8x32xf32>
    %87 = arith.maximumf %81, %86 : vector<8x32xf32>
    %88 = vector.extract_strided_slice %46 {offsets = [6, 0], sizes = [1, 32], strides = [1, 1]} : vector<8x32xf32> to vector<1x32xf32>
    %89 = vector.extract_strided_slice %52 {offsets = [0, 6], sizes = [8, 1], strides = [1, 1]} : vector<8x8xf32> to vector<8x1xf32>
    %90 = vector.broadcast %88 : vector<1x32xf32> to vector<8x32xf32>
    %91 = vector.broadcast %89 : vector<8x1xf32> to vector<8x32xf32>
    %92 = arith.addf %90, %91 : vector<8x32xf32>
    %93 = arith.maximumf %87, %92 : vector<8x32xf32>
    %94 = vector.extract_strided_slice %46 {offsets = [7, 0], sizes = [1, 32], strides = [1, 1]} : vector<8x32xf32> to vector<1x32xf32>
    %95 = vector.extract_strided_slice %52 {offsets = [0, 7], sizes = [8, 1], strides = [1, 1]} : vector<8x8xf32> to vector<8x1xf32>
    %96 = vector.broadcast %94 : vector<1x32xf32> to vector<8x32xf32>
    %97 = vector.broadcast %95 : vector<8x1xf32> to vector<8x32xf32>
    %98 = arith.addf %96, %97 : vector<8x32xf32>
    %99 = arith.maximumf %93, %98 : vector<8x32xf32>
    %cst_15 = arith.constant dense<0.000000e+00> : vector<8x32xf32>
    %100 = tpu.matmul %99, %38, %cst_15 {dimension_numbers = #tpu.dot_dimension_numbers<[1], [0], [0], [1], [0, 0, 1, 1], [], []>} : vector<8x32xf32>, vector<32x32xf32>, vector<8x32xf32> -> vector<8x32xf32>
    %101 = arith.addf %100, %47 : vector<8x32xf32>
    %cst_16 = arith.constant 0.000000e+00 : f32
    %102 = vector.broadcast %cst_16 : f32 to vector<8x32xf32>
    %103 = arith.maximumf %101, %102 : vector<8x32xf32>
    %104 = vector.broadcast %40 : vector<1x32xf32> to vector<8x32xf32>
    %105 = arith.mulf %103, %104 : vector<8x32xf32>
    %cst_17 = arith.constant dense<0.000000e+00> : vector<8xf32>
    %106 = vector.multi_reduction <add>, %105, %cst_17 [1] : vector<8x32xf32> to vector<8xf32>
    %107 = vector.shape_cast %106 : vector<8xf32> to vector<8x1xf32>
    %108 = vector.broadcast %107 : vector<8x1xf32> to vector<8x8xf32>
    %109 = arith.mulf %108, %7 : vector<8x8xf32>
    %cst_18 = arith.constant dense<0.000000e+00> : vector<8xf32>
    %110 = vector.multi_reduction <add>, %109, %cst_18 [0] : vector<8x8xf32> to vector<8xf32>
    %111 = vector.shape_cast %110 : vector<8xf32> to vector<1x8xf32>
    %112 = vector.broadcast %111 : vector<1x8xf32> to vector<8x8xf32>
    %113 = vector.broadcast %107 : vector<8x1xf32> to vector<8x8xf32>
    %114 = arith.cmpf ogt, %112, %113 : vector<8x8xf32>
    %115 = vector.broadcast %111 : vector<1x8xf32> to vector<8x8xf32>
    %116 = vector.broadcast %107 : vector<8x1xf32> to vector<8x8xf32>
    %117 = arith.cmpf oeq, %115, %116 : vector<8x8xf32>
    %118 = arith.andi %117, %8 : vector<8x8xi1>
    %119 = arith.ori %114, %118 : vector<8x8xi1>
    %120 = arith.extui %119 : vector<8x8xi1> to vector<8x8xi32>
    %121 = arith.sitofp %120 : vector<8x8xi32> to vector<8x8xf32>
    %122 = vector.broadcast %32 : vector<1x8xf32> to vector<8x8xf32>
    %123 = arith.mulf %17, %122 : vector<8x8xf32>
    %124 = arith.mulf %123, %121 : vector<8x8xf32>
    %cst_19 = arith.constant dense<0.000000e+00> : vector<8xf32>
    %125 = vector.multi_reduction <add>, %124, %cst_19 [1] : vector<8x8xf32> to vector<8xf32>
    %126 = vector.shape_cast %125 : vector<8xf32> to vector<8x1xf32>
    %127 = vector.broadcast %31 : vector<8x1xf32> to vector<8x2xf32>
    %128 = arith.mulf %23, %127 : vector<8x2xf32>
    %cst_20 = arith.constant dense<0.000000e+00> : vector<2xf32>
    %129 = vector.multi_reduction <add>, %128, %cst_20 [0] : vector<8x2xf32> to vector<2xf32>
    %130 = vector.shape_cast %129 : vector<2xf32> to vector<1x2xf32>
    %cst_21 = arith.constant 8.000000e-01 : f32
    %131 = vector.broadcast %cst_21 : f32 to vector<1x2xf32>
    %132 = arith.mulf %131, %130 : vector<1x2xf32>
    %133 = math.ceil %132 : vector<1x2xf32>
    %134 = vector.broadcast %133 : vector<1x2xf32> to vector<8x2xf32>
    %135 = arith.mulf %23, %134 : vector<8x2xf32>
    %cst_22 = arith.constant dense<0.000000e+00> : vector<8xf32>
    %136 = vector.multi_reduction <add>, %135, %cst_22 [1] : vector<8x2xf32> to vector<8xf32>
    %137 = vector.shape_cast %136 : vector<8xf32> to vector<8x1xf32>
    %138 = arith.cmpf olt, %126, %137 : vector<8x1xf32>
    %139 = arith.extui %138 : vector<8x1xi1> to vector<8x1xi32>
    %140 = arith.sitofp %139 : vector<8x1xi32> to vector<8x1xf32>
    %141 = arith.mulf %31, %140 : vector<8x1xf32>
    %142 = vector.broadcast %141 : vector<8x1xf32> to vector<8x8xf32>
    %143 = arith.mulf %142, %7 : vector<8x8xf32>
    %cst_23 = arith.constant dense<0.000000e+00> : vector<8xf32>
    %144 = vector.multi_reduction <add>, %143, %cst_23 [0] : vector<8x8xf32> to vector<8xf32>
    %145 = vector.shape_cast %144 : vector<8xf32> to vector<1x8xf32>
    %146 = math.tanh %107 : vector<8x1xf32>
    %147 = vector.broadcast %146 : vector<8x1xf32> to vector<8x32xf32>
    %148 = arith.mulf %103, %147 : vector<8x32xf32>
    %149 = vector.broadcast %141 : vector<8x1xf32> to vector<8x32xf32>
    %150 = arith.mulf %148, %149 : vector<8x32xf32>
    %151 = vector.broadcast %141 : vector<8x1xf32> to vector<8x8xf32>
    %152 = arith.mulf %1, %151 : vector<8x8xf32>
    %153 = vector.broadcast %145 : vector<1x8xf32> to vector<8x8xf32>
    %154 = arith.mulf %152, %153 : vector<8x8xf32>
    %155 = vector.broadcast %145 : vector<1x8xf32> to vector<2x8xf32>
    %156 = arith.mulf %29, %155 : vector<2x8xf32>
    %cst_24 = arith.constant dense<0.000000e+00> : vector<2xf32>
    %157 = vector.multi_reduction <add>, %156, %cst_24 [1] : vector<2x8xf32> to vector<2xf32>
    %158 = vector.shape_cast %157 : vector<2xf32> to vector<2x1xf32>
    %cst_25 = arith.constant dense<0.000000e+00> : vector<2x32xf32>
    %159 = tpu.matmul %156, %150, %cst_25 {dimension_numbers = #tpu.dot_dimension_numbers<[1], [0], [0], [1], [0, 0, 1, 1], [], []>} : vector<2x8xf32>, vector<8x32xf32>, vector<2x32xf32> -> vector<2x32xf32>
    %cst_26 = arith.constant 1.000000e+00 : f32
    %160 = vector.broadcast %cst_26 : f32 to vector<2x1xf32>
    %161 = arith.maximumf %158, %160 : vector<2x1xf32>
    %162 = vector.broadcast %161 : vector<2x1xf32> to vector<2x32xf32>
    %163 = arith.divf %159, %162 : vector<2x32xf32>
    %164 = arith.addf %34, %163 : vector<2x32xf32>
    %165 = vector.broadcast %141 : vector<8x1xf32> to vector<8x2xf32>
    %166 = arith.mulf %23, %165 : vector<8x2xf32>
    %167 = vector.extract_strided_slice %166 {offsets = [0, 0], sizes = [8, 1], strides = [1, 1]} : vector<8x2xf32> to vector<8x1xf32>
    %cst_27 = arith.constant 1.000000e+00 : f32
    %168 = vector.broadcast %cst_27 : f32 to vector<8x1xf32>
    %169 = arith.subf %167, %168 : vector<8x1xf32>
    %cst_28 = arith.constant 1.000000e+30 : f32
    %170 = vector.broadcast %cst_28 : f32 to vector<8x1xf32>
    %171 = arith.mulf %169, %170 : vector<8x1xf32>
    %172 = vector.broadcast %171 : vector<8x1xf32> to vector<8x32xf32>
    %173 = arith.addf %150, %172 : vector<8x32xf32>
    %cst_29 = arith.constant dense<0xFF800000> : vector<32xf32>
    %174 = vector.multi_reduction <maximumf>, %173, %cst_29 [0] : vector<8x32xf32> to vector<32xf32>
    %175 = vector.shape_cast %174 : vector<32xf32> to vector<1x32xf32>
    %176 = vector.extract_strided_slice %158 {offsets = [0, 0], sizes = [1, 1], strides = [1, 1]} : vector<2x1xf32> to vector<1x1xf32>
    %cst_30 = arith.constant 0.000000e+00 : f32
    %177 = vector.broadcast %cst_30 : f32 to vector<1x1xf32>
    %178 = arith.cmpf ogt, %176, %177 : vector<1x1xf32>
    %cst_31 = arith.constant 0.000000e+00 : f32
    %179 = vector.shape_cast %178 : vector<1x1xi1> to vector<1x1xi1>
    %180 = vector.broadcast %179 : vector<1x1xi1> to vector<1x32xi1>
    %181 = vector.broadcast %cst_31 : f32 to vector<1x32xf32>
    %182 = arith.select %180, %175, %181 : vector<1x32xi1>, vector<1x32xf32>
    %c0_i32 = arith.constant 0 : i32
    %183 = vector.broadcast %c0_i32 : i32 to vector<2x32xi32>
    %184 = arith.cmpi eq, %30, %183 : vector<2x32xi32>
    %cst_32 = arith.constant 0.000000e+00 : f32
    %185 = vector.shape_cast %182 : vector<1x32xf32> to vector<1x32xf32>
    %186 = vector.broadcast %185 : vector<1x32xf32> to vector<2x32xf32>
    %187 = vector.broadcast %cst_32 : f32 to vector<2x32xf32>
    %188 = arith.select %184, %186, %187 : vector<2x32xi1>, vector<2x32xf32>
    %189 = arith.addf %33, %188 : vector<2x32xf32>
    %190 = vector.extract_strided_slice %166 {offsets = [0, 1], sizes = [8, 1], strides = [1, 1]} : vector<8x2xf32> to vector<8x1xf32>
    %cst_33 = arith.constant 1.000000e+00 : f32
    %191 = vector.broadcast %cst_33 : f32 to vector<8x1xf32>
    %192 = arith.subf %190, %191 : vector<8x1xf32>
    %cst_34 = arith.constant 1.000000e+30 : f32
    %193 = vector.broadcast %cst_34 : f32 to vector<8x1xf32>
    %194 = arith.mulf %192, %193 : vector<8x1xf32>
    %195 = vector.broadcast %194 : vector<8x1xf32> to vector<8x32xf32>
    %196 = arith.addf %150, %195 : vector<8x32xf32>
    %cst_35 = arith.constant dense<0xFF800000> : vector<32xf32>
    %197 = vector.multi_reduction <maximumf>, %196, %cst_35 [0] : vector<8x32xf32> to vector<32xf32>
    %198 = vector.shape_cast %197 : vector<32xf32> to vector<1x32xf32>
    %199 = vector.extract_strided_slice %158 {offsets = [1, 0], sizes = [1, 1], strides = [1, 1]} : vector<2x1xf32> to vector<1x1xf32>
    %cst_36 = arith.constant 0.000000e+00 : f32
    %200 = vector.broadcast %cst_36 : f32 to vector<1x1xf32>
    %201 = arith.cmpf ogt, %199, %200 : vector<1x1xf32>
    %cst_37 = arith.constant 0.000000e+00 : f32
    %202 = vector.shape_cast %201 : vector<1x1xi1> to vector<1x1xi1>
    %203 = vector.broadcast %202 : vector<1x1xi1> to vector<1x32xi1>
    %204 = vector.broadcast %cst_37 : f32 to vector<1x32xf32>
    %205 = arith.select %203, %198, %204 : vector<1x32xi1>, vector<1x32xf32>
    %c1_i32 = arith.constant 1 : i32
    %206 = vector.broadcast %c1_i32 : i32 to vector<2x32xi32>
    %207 = arith.cmpi eq, %30, %206 : vector<2x32xi32>
    %cst_38 = arith.constant 0.000000e+00 : f32
    %208 = vector.shape_cast %205 : vector<1x32xf32> to vector<1x32xf32>
    %209 = vector.broadcast %208 : vector<1x32xf32> to vector<2x32xf32>
    %210 = vector.broadcast %cst_38 : f32 to vector<2x32xf32>
    %211 = arith.select %207, %209, %210 : vector<2x32xi1>, vector<2x32xf32>
    %212 = arith.addf %189, %211 : vector<2x32xf32>
    %c1 = arith.constant 1 : index
    %c0_39 = arith.constant 0 : index
    %c0_40 = arith.constant 0 : index
    %213 = vector.load %arg2[%c1, %c0_39, %c0_40] : memref<3x80x64xf32, #tpu.memory_space<vmem>>, vector<1x80x64xf32>
    %214 = vector.shape_cast %213 : vector<1x80x64xf32> to vector<80x64xf32>
    %215 = vector.extract_strided_slice %214 {offsets = [0, 0], sizes = [32, 64], strides = [1, 1]} : vector<80x64xf32> to vector<32x64xf32>
    %216 = vector.extract_strided_slice %214 {offsets = [32, 0], sizes = [32, 32], strides = [1, 1]} : vector<80x64xf32> to vector<32x32xf32>
    %217 = vector.extract_strided_slice %214 {offsets = [64, 0], sizes = [1, 32], strides = [1, 1]} : vector<80x64xf32> to vector<1x32xf32>
    %218 = vector.extract_strided_slice %214 {offsets = [72, 0], sizes = [1, 32], strides = [1, 1]} : vector<80x64xf32> to vector<1x32xf32>
    %cst_41 = arith.constant dense<0.000000e+00> : vector<8x64xf32>
    %219 = tpu.matmul %150, %215, %cst_41 {dimension_numbers = #tpu.dot_dimension_numbers<[1], [0], [0], [1], [0, 0, 1, 1], [], []>} : vector<8x32xf32>, vector<32x64xf32>, vector<8x64xf32> -> vector<8x64xf32>
    %220 = vector.extract_strided_slice %219 {offsets = [0, 0], sizes = [8, 32], strides = [1, 1]} : vector<8x64xf32> to vector<8x32xf32>
    %221 = vector.broadcast %217 : vector<1x32xf32> to vector<8x32xf32>
    %222 = arith.addf %220, %221 : vector<8x32xf32>
    %cst_42 = arith.constant 0.000000e+00 : f32
    %223 = vector.broadcast %cst_42 : f32 to vector<8x32xf32>
    %224 = arith.maximumf %222, %223 : vector<8x32xf32>
    %225 = vector.extract_strided_slice %219 {offsets = [0, 32], sizes = [8, 32], strides = [1, 1]} : vector<8x64xf32> to vector<8x32xf32>
    %226 = arith.maximumf %154, %7 : vector<8x8xf32>
    %cst_43 = arith.constant 1.000000e+00 : f32
    %227 = vector.broadcast %cst_43 : f32 to vector<8x8xf32>
    %228 = arith.subf %226, %227 : vector<8x8xf32>
    %cst_44 = arith.constant 1.000000e+30 : f32
    %229 = vector.broadcast %cst_44 : f32 to vector<8x8xf32>
    %230 = arith.mulf %228, %229 : vector<8x8xf32>
    %231 = vector.extract_strided_slice %224 {offsets = [0, 0], sizes = [1, 32], strides = [1, 1]} : vector<8x32xf32> to vector<1x32xf32>
    %232 = vector.extract_strided_slice %230 {offsets = [0, 0], sizes = [8, 1], strides = [1, 1]} : vector<8x8xf32> to vector<8x1xf32>
    %233 = vector.broadcast %231 : vector<1x32xf32> to vector<8x32xf32>
    %234 = vector.broadcast %232 : vector<8x1xf32> to vector<8x32xf32>
    %235 = arith.addf %233, %234 : vector<8x32xf32>
    %236 = vector.extract_strided_slice %224 {offsets = [1, 0], sizes = [1, 32], strides = [1, 1]} : vector<8x32xf32> to vector<1x32xf32>
    %237 = vector.extract_strided_slice %230 {offsets = [0, 1], sizes = [8, 1], strides = [1, 1]} : vector<8x8xf32> to vector<8x1xf32>
    %238 = vector.broadcast %236 : vector<1x32xf32> to vector<8x32xf32>
    %239 = vector.broadcast %237 : vector<8x1xf32> to vector<8x32xf32>
    %240 = arith.addf %238, %239 : vector<8x32xf32>
    %241 = arith.maximumf %235, %240 : vector<8x32xf32>
    %242 = vector.extract_strided_slice %224 {offsets = [2, 0], sizes = [1, 32], strides = [1, 1]} : vector<8x32xf32> to vector<1x32xf32>
    %243 = vector.extract_strided_slice %230 {offsets = [0, 2], sizes = [8, 1], strides = [1, 1]} : vector<8x8xf32> to vector<8x1xf32>
    %244 = vector.broadcast %242 : vector<1x32xf32> to vector<8x32xf32>
    %245 = vector.broadcast %243 : vector<8x1xf32> to vector<8x32xf32>
    %246 = arith.addf %244, %245 : vector<8x32xf32>
    %247 = arith.maximumf %241, %246 : vector<8x32xf32>
    %248 = vector.extract_strided_slice %224 {offsets = [3, 0], sizes = [1, 32], strides = [1, 1]} : vector<8x32xf32> to vector<1x32xf32>
    %249 = vector.extract_strided_slice %230 {offsets = [0, 3], sizes = [8, 1], strides = [1, 1]} : vector<8x8xf32> to vector<8x1xf32>
    %250 = vector.broadcast %248 : vector<1x32xf32> to vector<8x32xf32>
    %251 = vector.broadcast %249 : vector<8x1xf32> to vector<8x32xf32>
    %252 = arith.addf %250, %251 : vector<8x32xf32>
    %253 = arith.maximumf %247, %252 : vector<8x32xf32>
    %254 = vector.extract_strided_slice %224 {offsets = [4, 0], sizes = [1, 32], strides = [1, 1]} : vector<8x32xf32> to vector<1x32xf32>
    %255 = vector.extract_strided_slice %230 {offsets = [0, 4], sizes = [8, 1], strides = [1, 1]} : vector<8x8xf32> to vector<8x1xf32>
    %256 = vector.broadcast %254 : vector<1x32xf32> to vector<8x32xf32>
    %257 = vector.broadcast %255 : vector<8x1xf32> to vector<8x32xf32>
    %258 = arith.addf %256, %257 : vector<8x32xf32>
    %259 = arith.maximumf %253, %258 : vector<8x32xf32>
    %260 = vector.extract_strided_slice %224 {offsets = [5, 0], sizes = [1, 32], strides = [1, 1]} : vector<8x32xf32> to vector<1x32xf32>
    %261 = vector.extract_strided_slice %230 {offsets = [0, 5], sizes = [8, 1], strides = [1, 1]} : vector<8x8xf32> to vector<8x1xf32>
    %262 = vector.broadcast %260 : vector<1x32xf32> to vector<8x32xf32>
    %263 = vector.broadcast %261 : vector<8x1xf32> to vector<8x32xf32>
    %264 = arith.addf %262, %263 : vector<8x32xf32>
    %265 = arith.maximumf %259, %264 : vector<8x32xf32>
    %266 = vector.extract_strided_slice %224 {offsets = [6, 0], sizes = [1, 32], strides = [1, 1]} : vector<8x32xf32> to vector<1x32xf32>
    %267 = vector.extract_strided_slice %230 {offsets = [0, 6], sizes = [8, 1], strides = [1, 1]} : vector<8x8xf32> to vector<8x1xf32>
    %268 = vector.broadcast %266 : vector<1x32xf32> to vector<8x32xf32>
    %269 = vector.broadcast %267 : vector<8x1xf32> to vector<8x32xf32>
    %270 = arith.addf %268, %269 : vector<8x32xf32>
    %271 = arith.maximumf %265, %270 : vector<8x32xf32>
    %272 = vector.extract_strided_slice %224 {offsets = [7, 0], sizes = [1, 32], strides = [1, 1]} : vector<8x32xf32> to vector<1x32xf32>
    %273 = vector.extract_strided_slice %230 {offsets = [0, 7], sizes = [8, 1], strides = [1, 1]} : vector<8x8xf32> to vector<8x1xf32>
    %274 = vector.broadcast %272 : vector<1x32xf32> to vector<8x32xf32>
    %275 = vector.broadcast %273 : vector<8x1xf32> to vector<8x32xf32>
    %276 = arith.addf %274, %275 : vector<8x32xf32>
    %277 = arith.maximumf %271, %276 : vector<8x32xf32>
    %cst_45 = arith.constant dense<0.000000e+00> : vector<8x32xf32>
    %278 = tpu.matmul %277, %216, %cst_45 {dimension_numbers = #tpu.dot_dimension_numbers<[1], [0], [0], [1], [0, 0, 1, 1], [], []>} : vector<8x32xf32>, vector<32x32xf32>, vector<8x32xf32> -> vector<8x32xf32>
    %279 = arith.addf %278, %225 : vector<8x32xf32>
    %cst_46 = arith.constant 0.000000e+00 : f32
    %280 = vector.broadcast %cst_46 : f32 to vector<8x32xf32>
    %281 = arith.maximumf %279, %280 : vector<8x32xf32>
    %282 = vector.broadcast %218 : vector<1x32xf32> to vector<8x32xf32>
    %283 = arith.mulf %281, %282 : vector<8x32xf32>
    %cst_47 = arith.constant dense<0.000000e+00> : vector<8xf32>
    %284 = vector.multi_reduction <add>, %283, %cst_47 [1] : vector<8x32xf32> to vector<8xf32>
    %285 = vector.shape_cast %284 : vector<8xf32> to vector<8x1xf32>
    %286 = vector.broadcast %285 : vector<8x1xf32> to vector<8x8xf32>
    %287 = arith.mulf %286, %7 : vector<8x8xf32>
    %cst_48 = arith.constant dense<0.000000e+00> : vector<8xf32>
    %288 = vector.multi_reduction <add>, %287, %cst_48 [0] : vector<8x8xf32> to vector<8xf32>
    %289 = vector.shape_cast %288 : vector<8xf32> to vector<1x8xf32>
    %290 = vector.broadcast %289 : vector<1x8xf32> to vector<8x8xf32>
    %291 = vector.broadcast %285 : vector<8x1xf32> to vector<8x8xf32>
    %292 = arith.cmpf ogt, %290, %291 : vector<8x8xf32>
    %293 = vector.broadcast %289 : vector<1x8xf32> to vector<8x8xf32>
    %294 = vector.broadcast %285 : vector<8x1xf32> to vector<8x8xf32>
    %295 = arith.cmpf oeq, %293, %294 : vector<8x8xf32>
    %296 = arith.andi %295, %8 : vector<8x8xi1>
    %297 = arith.ori %292, %296 : vector<8x8xi1>
    %298 = arith.extui %297 : vector<8x8xi1> to vector<8x8xi32>
    %299 = arith.sitofp %298 : vector<8x8xi32> to vector<8x8xf32>
    %300 = vector.broadcast %145 : vector<1x8xf32> to vector<8x8xf32>
    %301 = arith.mulf %17, %300 : vector<8x8xf32>
    %302 = arith.mulf %301, %299 : vector<8x8xf32>
    %cst_49 = arith.constant dense<0.000000e+00> : vector<8xf32>
    %303 = vector.multi_reduction <add>, %302, %cst_49 [1] : vector<8x8xf32> to vector<8xf32>
    %304 = vector.shape_cast %303 : vector<8xf32> to vector<8x1xf32>
    %305 = vector.broadcast %141 : vector<8x1xf32> to vector<8x2xf32>
    %306 = arith.mulf %23, %305 : vector<8x2xf32>
    %cst_50 = arith.constant dense<0.000000e+00> : vector<2xf32>
    %307 = vector.multi_reduction <add>, %306, %cst_50 [0] : vector<8x2xf32> to vector<2xf32>
    %308 = vector.shape_cast %307 : vector<2xf32> to vector<1x2xf32>
    %cst_51 = arith.constant 8.000000e-01 : f32
    %309 = vector.broadcast %cst_51 : f32 to vector<1x2xf32>
    %310 = arith.mulf %309, %308 : vector<1x2xf32>
    %311 = math.ceil %310 : vector<1x2xf32>
    %312 = vector.broadcast %311 : vector<1x2xf32> to vector<8x2xf32>
    %313 = arith.mulf %23, %312 : vector<8x2xf32>
    %cst_52 = arith.constant dense<0.000000e+00> : vector<8xf32>
    %314 = vector.multi_reduction <add>, %313, %cst_52 [1] : vector<8x2xf32> to vector<8xf32>
    %315 = vector.shape_cast %314 : vector<8xf32> to vector<8x1xf32>
    %316 = arith.cmpf olt, %304, %315 : vector<8x1xf32>
    %317 = arith.extui %316 : vector<8x1xi1> to vector<8x1xi32>
    %318 = arith.sitofp %317 : vector<8x1xi32> to vector<8x1xf32>
    %319 = arith.mulf %141, %318 : vector<8x1xf32>
    %320 = vector.broadcast %319 : vector<8x1xf32> to vector<8x8xf32>
    %321 = arith.mulf %320, %7 : vector<8x8xf32>
    %cst_53 = arith.constant dense<0.000000e+00> : vector<8xf32>
    %322 = vector.multi_reduction <add>, %321, %cst_53 [0] : vector<8x8xf32> to vector<8xf32>
    %323 = vector.shape_cast %322 : vector<8xf32> to vector<1x8xf32>
    %324 = math.tanh %285 : vector<8x1xf32>
    %325 = vector.broadcast %324 : vector<8x1xf32> to vector<8x32xf32>
    %326 = arith.mulf %281, %325 : vector<8x32xf32>
    %327 = vector.broadcast %319 : vector<8x1xf32> to vector<8x32xf32>
    %328 = arith.mulf %326, %327 : vector<8x32xf32>
    %329 = vector.broadcast %319 : vector<8x1xf32> to vector<8x8xf32>
    %330 = arith.mulf %154, %329 : vector<8x8xf32>
    %331 = vector.broadcast %323 : vector<1x8xf32> to vector<8x8xf32>
    %332 = arith.mulf %330, %331 : vector<8x8xf32>
    %333 = vector.broadcast %323 : vector<1x8xf32> to vector<2x8xf32>
    %334 = arith.mulf %29, %333 : vector<2x8xf32>
    %cst_54 = arith.constant dense<0.000000e+00> : vector<2xf32>
    %335 = vector.multi_reduction <add>, %334, %cst_54 [1] : vector<2x8xf32> to vector<2xf32>
    %336 = vector.shape_cast %335 : vector<2xf32> to vector<2x1xf32>
    %cst_55 = arith.constant dense<0.000000e+00> : vector<2x32xf32>
    %337 = tpu.matmul %334, %328, %cst_55 {dimension_numbers = #tpu.dot_dimension_numbers<[1], [0], [0], [1], [0, 0, 1, 1], [], []>} : vector<2x8xf32>, vector<8x32xf32>, vector<2x32xf32> -> vector<2x32xf32>
    %cst_56 = arith.constant 1.000000e+00 : f32
    %338 = vector.broadcast %cst_56 : f32 to vector<2x1xf32>
    %339 = arith.maximumf %336, %338 : vector<2x1xf32>
    %340 = vector.broadcast %339 : vector<2x1xf32> to vector<2x32xf32>
    %341 = arith.divf %337, %340 : vector<2x32xf32>
    %342 = arith.addf %164, %341 : vector<2x32xf32>
    %343 = vector.broadcast %319 : vector<8x1xf32> to vector<8x2xf32>
    %344 = arith.mulf %23, %343 : vector<8x2xf32>
    %345 = vector.extract_strided_slice %344 {offsets = [0, 0], sizes = [8, 1], strides = [1, 1]} : vector<8x2xf32> to vector<8x1xf32>
    %cst_57 = arith.constant 1.000000e+00 : f32
    %346 = vector.broadcast %cst_57 : f32 to vector<8x1xf32>
    %347 = arith.subf %345, %346 : vector<8x1xf32>
    %cst_58 = arith.constant 1.000000e+30 : f32
    %348 = vector.broadcast %cst_58 : f32 to vector<8x1xf32>
    %349 = arith.mulf %347, %348 : vector<8x1xf32>
    %350 = vector.broadcast %349 : vector<8x1xf32> to vector<8x32xf32>
    %351 = arith.addf %328, %350 : vector<8x32xf32>
    %cst_59 = arith.constant dense<0xFF800000> : vector<32xf32>
    %352 = vector.multi_reduction <maximumf>, %351, %cst_59 [0] : vector<8x32xf32> to vector<32xf32>
    %353 = vector.shape_cast %352 : vector<32xf32> to vector<1x32xf32>
    %354 = vector.extract_strided_slice %336 {offsets = [0, 0], sizes = [1, 1], strides = [1, 1]} : vector<2x1xf32> to vector<1x1xf32>
    %cst_60 = arith.constant 0.000000e+00 : f32
    %355 = vector.broadcast %cst_60 : f32 to vector<1x1xf32>
    %356 = arith.cmpf ogt, %354, %355 : vector<1x1xf32>
    %cst_61 = arith.constant 0.000000e+00 : f32
    %357 = vector.shape_cast %356 : vector<1x1xi1> to vector<1x1xi1>
    %358 = vector.broadcast %357 : vector<1x1xi1> to vector<1x32xi1>
    %359 = vector.broadcast %cst_61 : f32 to vector<1x32xf32>
    %360 = arith.select %358, %353, %359 : vector<1x32xi1>, vector<1x32xf32>
    %c0_i32_62 = arith.constant 0 : i32
    %361 = vector.broadcast %c0_i32_62 : i32 to vector<2x32xi32>
    %362 = arith.cmpi eq, %30, %361 : vector<2x32xi32>
    %cst_63 = arith.constant 0.000000e+00 : f32
    %363 = vector.shape_cast %360 : vector<1x32xf32> to vector<1x32xf32>
    %364 = vector.broadcast %363 : vector<1x32xf32> to vector<2x32xf32>
    %365 = vector.broadcast %cst_63 : f32 to vector<2x32xf32>
    %366 = arith.select %362, %364, %365 : vector<2x32xi1>, vector<2x32xf32>
    %367 = arith.addf %212, %366 : vector<2x32xf32>
    %368 = vector.extract_strided_slice %344 {offsets = [0, 1], sizes = [8, 1], strides = [1, 1]} : vector<8x2xf32> to vector<8x1xf32>
    %cst_64 = arith.constant 1.000000e+00 : f32
    %369 = vector.broadcast %cst_64 : f32 to vector<8x1xf32>
    %370 = arith.subf %368, %369 : vector<8x1xf32>
    %cst_65 = arith.constant 1.000000e+30 : f32
    %371 = vector.broadcast %cst_65 : f32 to vector<8x1xf32>
    %372 = arith.mulf %370, %371 : vector<8x1xf32>
    %373 = vector.broadcast %372 : vector<8x1xf32> to vector<8x32xf32>
    %374 = arith.addf %328, %373 : vector<8x32xf32>
    %cst_66 = arith.constant dense<0xFF800000> : vector<32xf32>
    %375 = vector.multi_reduction <maximumf>, %374, %cst_66 [0] : vector<8x32xf32> to vector<32xf32>
    %376 = vector.shape_cast %375 : vector<32xf32> to vector<1x32xf32>
    %377 = vector.extract_strided_slice %336 {offsets = [1, 0], sizes = [1, 1], strides = [1, 1]} : vector<2x1xf32> to vector<1x1xf32>
    %cst_67 = arith.constant 0.000000e+00 : f32
    %378 = vector.broadcast %cst_67 : f32 to vector<1x1xf32>
    %379 = arith.cmpf ogt, %377, %378 : vector<1x1xf32>
    %cst_68 = arith.constant 0.000000e+00 : f32
    %380 = vector.shape_cast %379 : vector<1x1xi1> to vector<1x1xi1>
    %381 = vector.broadcast %380 : vector<1x1xi1> to vector<1x32xi1>
    %382 = vector.broadcast %cst_68 : f32 to vector<1x32xf32>
    %383 = arith.select %381, %376, %382 : vector<1x32xi1>, vector<1x32xf32>
    %c1_i32_69 = arith.constant 1 : i32
    %384 = vector.broadcast %c1_i32_69 : i32 to vector<2x32xi32>
    %385 = arith.cmpi eq, %30, %384 : vector<2x32xi32>
    %cst_70 = arith.constant 0.000000e+00 : f32
    %386 = vector.shape_cast %383 : vector<1x32xf32> to vector<1x32xf32>
    %387 = vector.broadcast %386 : vector<1x32xf32> to vector<2x32xf32>
    %388 = vector.broadcast %cst_70 : f32 to vector<2x32xf32>
    %389 = arith.select %385, %387, %388 : vector<2x32xi1>, vector<2x32xf32>
    %390 = arith.addf %367, %389 : vector<2x32xf32>
    %c2 = arith.constant 2 : index
    %c0_71 = arith.constant 0 : index
    %c0_72 = arith.constant 0 : index
    %391 = vector.load %arg2[%c2, %c0_71, %c0_72] : memref<3x80x64xf32, #tpu.memory_space<vmem>>, vector<1x80x64xf32>
    %392 = vector.shape_cast %391 : vector<1x80x64xf32> to vector<80x64xf32>
    %393 = vector.extract_strided_slice %392 {offsets = [0, 0], sizes = [32, 64], strides = [1, 1]} : vector<80x64xf32> to vector<32x64xf32>
    %394 = vector.extract_strided_slice %392 {offsets = [32, 0], sizes = [32, 32], strides = [1, 1]} : vector<80x64xf32> to vector<32x32xf32>
    %395 = vector.extract_strided_slice %392 {offsets = [64, 0], sizes = [1, 32], strides = [1, 1]} : vector<80x64xf32> to vector<1x32xf32>
    %396 = vector.extract_strided_slice %392 {offsets = [72, 0], sizes = [1, 32], strides = [1, 1]} : vector<80x64xf32> to vector<1x32xf32>
    %cst_73 = arith.constant dense<0.000000e+00> : vector<8x64xf32>
    %397 = tpu.matmul %328, %393, %cst_73 {dimension_numbers = #tpu.dot_dimension_numbers<[1], [0], [0], [1], [0, 0, 1, 1], [], []>} : vector<8x32xf32>, vector<32x64xf32>, vector<8x64xf32> -> vector<8x64xf32>
    %398 = vector.extract_strided_slice %397 {offsets = [0, 0], sizes = [8, 32], strides = [1, 1]} : vector<8x64xf32> to vector<8x32xf32>
    %399 = vector.broadcast %395 : vector<1x32xf32> to vector<8x32xf32>
    %400 = arith.addf %398, %399 : vector<8x32xf32>
    %cst_74 = arith.constant 0.000000e+00 : f32
    %401 = vector.broadcast %cst_74 : f32 to vector<8x32xf32>
    %402 = arith.maximumf %400, %401 : vector<8x32xf32>
    %403 = vector.extract_strided_slice %397 {offsets = [0, 32], sizes = [8, 32], strides = [1, 1]} : vector<8x64xf32> to vector<8x32xf32>
    %404 = arith.maximumf %332, %7 : vector<8x8xf32>
    %cst_75 = arith.constant 1.000000e+00 : f32
    %405 = vector.broadcast %cst_75 : f32 to vector<8x8xf32>
    %406 = arith.subf %404, %405 : vector<8x8xf32>
    %cst_76 = arith.constant 1.000000e+30 : f32
    %407 = vector.broadcast %cst_76 : f32 to vector<8x8xf32>
    %408 = arith.mulf %406, %407 : vector<8x8xf32>
    %409 = vector.extract_strided_slice %402 {offsets = [0, 0], sizes = [1, 32], strides = [1, 1]} : vector<8x32xf32> to vector<1x32xf32>
    %410 = vector.extract_strided_slice %408 {offsets = [0, 0], sizes = [8, 1], strides = [1, 1]} : vector<8x8xf32> to vector<8x1xf32>
    %411 = vector.broadcast %409 : vector<1x32xf32> to vector<8x32xf32>
    %412 = vector.broadcast %410 : vector<8x1xf32> to vector<8x32xf32>
    %413 = arith.addf %411, %412 : vector<8x32xf32>
    %414 = vector.extract_strided_slice %402 {offsets = [1, 0], sizes = [1, 32], strides = [1, 1]} : vector<8x32xf32> to vector<1x32xf32>
    %415 = vector.extract_strided_slice %408 {offsets = [0, 1], sizes = [8, 1], strides = [1, 1]} : vector<8x8xf32> to vector<8x1xf32>
    %416 = vector.broadcast %414 : vector<1x32xf32> to vector<8x32xf32>
    %417 = vector.broadcast %415 : vector<8x1xf32> to vector<8x32xf32>
    %418 = arith.addf %416, %417 : vector<8x32xf32>
    %419 = arith.maximumf %413, %418 : vector<8x32xf32>
    %420 = vector.extract_strided_slice %402 {offsets = [2, 0], sizes = [1, 32], strides = [1, 1]} : vector<8x32xf32> to vector<1x32xf32>
    %421 = vector.extract_strided_slice %408 {offsets = [0, 2], sizes = [8, 1], strides = [1, 1]} : vector<8x8xf32> to vector<8x1xf32>
    %422 = vector.broadcast %420 : vector<1x32xf32> to vector<8x32xf32>
    %423 = vector.broadcast %421 : vector<8x1xf32> to vector<8x32xf32>
    %424 = arith.addf %422, %423 : vector<8x32xf32>
    %425 = arith.maximumf %419, %424 : vector<8x32xf32>
    %426 = vector.extract_strided_slice %402 {offsets = [3, 0], sizes = [1, 32], strides = [1, 1]} : vector<8x32xf32> to vector<1x32xf32>
    %427 = vector.extract_strided_slice %408 {offsets = [0, 3], sizes = [8, 1], strides = [1, 1]} : vector<8x8xf32> to vector<8x1xf32>
    %428 = vector.broadcast %426 : vector<1x32xf32> to vector<8x32xf32>
    %429 = vector.broadcast %427 : vector<8x1xf32> to vector<8x32xf32>
    %430 = arith.addf %428, %429 : vector<8x32xf32>
    %431 = arith.maximumf %425, %430 : vector<8x32xf32>
    %432 = vector.extract_strided_slice %402 {offsets = [4, 0], sizes = [1, 32], strides = [1, 1]} : vector<8x32xf32> to vector<1x32xf32>
    %433 = vector.extract_strided_slice %408 {offsets = [0, 4], sizes = [8, 1], strides = [1, 1]} : vector<8x8xf32> to vector<8x1xf32>
    %434 = vector.broadcast %432 : vector<1x32xf32> to vector<8x32xf32>
    %435 = vector.broadcast %433 : vector<8x1xf32> to vector<8x32xf32>
    %436 = arith.addf %434, %435 : vector<8x32xf32>
    %437 = arith.maximumf %431, %436 : vector<8x32xf32>
    %438 = vector.extract_strided_slice %402 {offsets = [5, 0], sizes = [1, 32], strides = [1, 1]} : vector<8x32xf32> to vector<1x32xf32>
    %439 = vector.extract_strided_slice %408 {offsets = [0, 5], sizes = [8, 1], strides = [1, 1]} : vector<8x8xf32> to vector<8x1xf32>
    %440 = vector.broadcast %438 : vector<1x32xf32> to vector<8x32xf32>
    %441 = vector.broadcast %439 : vector<8x1xf32> to vector<8x32xf32>
    %442 = arith.addf %440, %441 : vector<8x32xf32>
    %443 = arith.maximumf %437, %442 : vector<8x32xf32>
    %444 = vector.extract_strided_slice %402 {offsets = [6, 0], sizes = [1, 32], strides = [1, 1]} : vector<8x32xf32> to vector<1x32xf32>
    %445 = vector.extract_strided_slice %408 {offsets = [0, 6], sizes = [8, 1], strides = [1, 1]} : vector<8x8xf32> to vector<8x1xf32>
    %446 = vector.broadcast %444 : vector<1x32xf32> to vector<8x32xf32>
    %447 = vector.broadcast %445 : vector<8x1xf32> to vector<8x32xf32>
    %448 = arith.addf %446, %447 : vector<8x32xf32>
    %449 = arith.maximumf %443, %448 : vector<8x32xf32>
    %450 = vector.extract_strided_slice %402 {offsets = [7, 0], sizes = [1, 32], strides = [1, 1]} : vector<8x32xf32> to vector<1x32xf32>
    %451 = vector.extract_strided_slice %408 {offsets = [0, 7], sizes = [8, 1], strides = [1, 1]} : vector<8x8xf32> to vector<8x1xf32>
    %452 = vector.broadcast %450 : vector<1x32xf32> to vector<8x32xf32>
    %453 = vector.broadcast %451 : vector<8x1xf32> to vector<8x32xf32>
    %454 = arith.addf %452, %453 : vector<8x32xf32>
    %455 = arith.maximumf %449, %454 : vector<8x32xf32>
    %cst_77 = arith.constant dense<0.000000e+00> : vector<8x32xf32>
    %456 = tpu.matmul %455, %394, %cst_77 {dimension_numbers = #tpu.dot_dimension_numbers<[1], [0], [0], [1], [0, 0, 1, 1], [], []>} : vector<8x32xf32>, vector<32x32xf32>, vector<8x32xf32> -> vector<8x32xf32>
    %457 = arith.addf %456, %403 : vector<8x32xf32>
    %cst_78 = arith.constant 0.000000e+00 : f32
    %458 = vector.broadcast %cst_78 : f32 to vector<8x32xf32>
    %459 = arith.maximumf %457, %458 : vector<8x32xf32>
    %460 = vector.broadcast %396 : vector<1x32xf32> to vector<8x32xf32>
    %461 = arith.mulf %459, %460 : vector<8x32xf32>
    %cst_79 = arith.constant dense<0.000000e+00> : vector<8xf32>
    %462 = vector.multi_reduction <add>, %461, %cst_79 [1] : vector<8x32xf32> to vector<8xf32>
    %463 = vector.shape_cast %462 : vector<8xf32> to vector<8x1xf32>
    %464 = vector.broadcast %463 : vector<8x1xf32> to vector<8x8xf32>
    %465 = arith.mulf %464, %7 : vector<8x8xf32>
    %cst_80 = arith.constant dense<0.000000e+00> : vector<8xf32>
    %466 = vector.multi_reduction <add>, %465, %cst_80 [0] : vector<8x8xf32> to vector<8xf32>
    %467 = vector.shape_cast %466 : vector<8xf32> to vector<1x8xf32>
    %468 = vector.broadcast %467 : vector<1x8xf32> to vector<8x8xf32>
    %469 = vector.broadcast %463 : vector<8x1xf32> to vector<8x8xf32>
    %470 = arith.cmpf ogt, %468, %469 : vector<8x8xf32>
    %471 = vector.broadcast %467 : vector<1x8xf32> to vector<8x8xf32>
    %472 = vector.broadcast %463 : vector<8x1xf32> to vector<8x8xf32>
    %473 = arith.cmpf oeq, %471, %472 : vector<8x8xf32>
    %474 = arith.andi %473, %8 : vector<8x8xi1>
    %475 = arith.ori %470, %474 : vector<8x8xi1>
    %476 = arith.extui %475 : vector<8x8xi1> to vector<8x8xi32>
    %477 = arith.sitofp %476 : vector<8x8xi32> to vector<8x8xf32>
    %478 = vector.broadcast %323 : vector<1x8xf32> to vector<8x8xf32>
    %479 = arith.mulf %17, %478 : vector<8x8xf32>
    %480 = arith.mulf %479, %477 : vector<8x8xf32>
    %cst_81 = arith.constant dense<0.000000e+00> : vector<8xf32>
    %481 = vector.multi_reduction <add>, %480, %cst_81 [1] : vector<8x8xf32> to vector<8xf32>
    %482 = vector.shape_cast %481 : vector<8xf32> to vector<8x1xf32>
    %483 = vector.broadcast %319 : vector<8x1xf32> to vector<8x2xf32>
    %484 = arith.mulf %23, %483 : vector<8x2xf32>
    %cst_82 = arith.constant dense<0.000000e+00> : vector<2xf32>
    %485 = vector.multi_reduction <add>, %484, %cst_82 [0] : vector<8x2xf32> to vector<2xf32>
    %486 = vector.shape_cast %485 : vector<2xf32> to vector<1x2xf32>
    %cst_83 = arith.constant 8.000000e-01 : f32
    %487 = vector.broadcast %cst_83 : f32 to vector<1x2xf32>
    %488 = arith.mulf %487, %486 : vector<1x2xf32>
    %489 = math.ceil %488 : vector<1x2xf32>
    %490 = vector.broadcast %489 : vector<1x2xf32> to vector<8x2xf32>
    %491 = arith.mulf %23, %490 : vector<8x2xf32>
    %cst_84 = arith.constant dense<0.000000e+00> : vector<8xf32>
    %492 = vector.multi_reduction <add>, %491, %cst_84 [1] : vector<8x2xf32> to vector<8xf32>
    %493 = vector.shape_cast %492 : vector<8xf32> to vector<8x1xf32>
    %494 = arith.cmpf olt, %482, %493 : vector<8x1xf32>
    %495 = arith.extui %494 : vector<8x1xi1> to vector<8x1xi32>
    %496 = arith.sitofp %495 : vector<8x1xi32> to vector<8x1xf32>
    %497 = arith.mulf %319, %496 : vector<8x1xf32>
    %498 = vector.broadcast %497 : vector<8x1xf32> to vector<8x8xf32>
    %499 = arith.mulf %498, %7 : vector<8x8xf32>
    %cst_85 = arith.constant dense<0.000000e+00> : vector<8xf32>
    %500 = vector.multi_reduction <add>, %499, %cst_85 [0] : vector<8x8xf32> to vector<8xf32>
    %501 = vector.shape_cast %500 : vector<8xf32> to vector<1x8xf32>
    %502 = math.tanh %463 : vector<8x1xf32>
    %503 = vector.broadcast %502 : vector<8x1xf32> to vector<8x32xf32>
    %504 = arith.mulf %459, %503 : vector<8x32xf32>
    %505 = vector.broadcast %497 : vector<8x1xf32> to vector<8x32xf32>
    %506 = arith.mulf %504, %505 : vector<8x32xf32>
    %507 = vector.broadcast %501 : vector<1x8xf32> to vector<2x8xf32>
    %508 = arith.mulf %29, %507 : vector<2x8xf32>
    %cst_86 = arith.constant dense<0.000000e+00> : vector<2xf32>
    %509 = vector.multi_reduction <add>, %508, %cst_86 [1] : vector<2x8xf32> to vector<2xf32>
    %510 = vector.shape_cast %509 : vector<2xf32> to vector<2x1xf32>
    %cst_87 = arith.constant dense<0.000000e+00> : vector<2x32xf32>
    %511 = tpu.matmul %508, %506, %cst_87 {dimension_numbers = #tpu.dot_dimension_numbers<[1], [0], [0], [1], [0, 0, 1, 1], [], []>} : vector<2x8xf32>, vector<8x32xf32>, vector<2x32xf32> -> vector<2x32xf32>
    %cst_88 = arith.constant 1.000000e+00 : f32
    %512 = vector.broadcast %cst_88 : f32 to vector<2x1xf32>
    %513 = arith.maximumf %510, %512 : vector<2x1xf32>
    %514 = vector.broadcast %513 : vector<2x1xf32> to vector<2x32xf32>
    %515 = arith.divf %511, %514 : vector<2x32xf32>
    %516 = arith.addf %342, %515 : vector<2x32xf32>
    %517 = vector.broadcast %497 : vector<8x1xf32> to vector<8x2xf32>
    %518 = arith.mulf %23, %517 : vector<8x2xf32>
    %519 = vector.extract_strided_slice %518 {offsets = [0, 0], sizes = [8, 1], strides = [1, 1]} : vector<8x2xf32> to vector<8x1xf32>
    %cst_89 = arith.constant 1.000000e+00 : f32
    %520 = vector.broadcast %cst_89 : f32 to vector<8x1xf32>
    %521 = arith.subf %519, %520 : vector<8x1xf32>
    %cst_90 = arith.constant 1.000000e+30 : f32
    %522 = vector.broadcast %cst_90 : f32 to vector<8x1xf32>
    %523 = arith.mulf %521, %522 : vector<8x1xf32>
    %524 = vector.broadcast %523 : vector<8x1xf32> to vector<8x32xf32>
    %525 = arith.addf %506, %524 : vector<8x32xf32>
    %cst_91 = arith.constant dense<0xFF800000> : vector<32xf32>
    %526 = vector.multi_reduction <maximumf>, %525, %cst_91 [0] : vector<8x32xf32> to vector<32xf32>
    %527 = vector.shape_cast %526 : vector<32xf32> to vector<1x32xf32>
    %528 = vector.extract_strided_slice %510 {offsets = [0, 0], sizes = [1, 1], strides = [1, 1]} : vector<2x1xf32> to vector<1x1xf32>
    %cst_92 = arith.constant 0.000000e+00 : f32
    %529 = vector.broadcast %cst_92 : f32 to vector<1x1xf32>
    %530 = arith.cmpf ogt, %528, %529 : vector<1x1xf32>
    %cst_93 = arith.constant 0.000000e+00 : f32
    %531 = vector.shape_cast %530 : vector<1x1xi1> to vector<1x1xi1>
    %532 = vector.broadcast %531 : vector<1x1xi1> to vector<1x32xi1>
    %533 = vector.broadcast %cst_93 : f32 to vector<1x32xf32>
    %534 = arith.select %532, %527, %533 : vector<1x32xi1>, vector<1x32xf32>
    %c0_i32_94 = arith.constant 0 : i32
    %535 = vector.broadcast %c0_i32_94 : i32 to vector<2x32xi32>
    %536 = arith.cmpi eq, %30, %535 : vector<2x32xi32>
    %cst_95 = arith.constant 0.000000e+00 : f32
    %537 = vector.shape_cast %534 : vector<1x32xf32> to vector<1x32xf32>
    %538 = vector.broadcast %537 : vector<1x32xf32> to vector<2x32xf32>
    %539 = vector.broadcast %cst_95 : f32 to vector<2x32xf32>
    %540 = arith.select %536, %538, %539 : vector<2x32xi1>, vector<2x32xf32>
    %541 = arith.addf %390, %540 : vector<2x32xf32>
    %542 = vector.extract_strided_slice %518 {offsets = [0, 1], sizes = [8, 1], strides = [1, 1]} : vector<8x2xf32> to vector<8x1xf32>
    %cst_96 = arith.constant 1.000000e+00 : f32
    %543 = vector.broadcast %cst_96 : f32 to vector<8x1xf32>
    %544 = arith.subf %542, %543 : vector<8x1xf32>
    %cst_97 = arith.constant 1.000000e+30 : f32
    %545 = vector.broadcast %cst_97 : f32 to vector<8x1xf32>
    %546 = arith.mulf %544, %545 : vector<8x1xf32>
    %547 = vector.broadcast %546 : vector<8x1xf32> to vector<8x32xf32>
    %548 = arith.addf %506, %547 : vector<8x32xf32>
    %cst_98 = arith.constant dense<0xFF800000> : vector<32xf32>
    %549 = vector.multi_reduction <maximumf>, %548, %cst_98 [0] : vector<8x32xf32> to vector<32xf32>
    %550 = vector.shape_cast %549 : vector<32xf32> to vector<1x32xf32>
    %551 = vector.extract_strided_slice %510 {offsets = [1, 0], sizes = [1, 1], strides = [1, 1]} : vector<2x1xf32> to vector<1x1xf32>
    %cst_99 = arith.constant 0.000000e+00 : f32
    %552 = vector.broadcast %cst_99 : f32 to vector<1x1xf32>
    %553 = arith.cmpf ogt, %551, %552 : vector<1x1xf32>
    %cst_100 = arith.constant 0.000000e+00 : f32
    %554 = vector.shape_cast %553 : vector<1x1xi1> to vector<1x1xi1>
    %555 = vector.broadcast %554 : vector<1x1xi1> to vector<1x32xi1>
    %556 = vector.broadcast %cst_100 : f32 to vector<1x32xf32>
    %557 = arith.select %555, %550, %556 : vector<1x32xi1>, vector<1x32xf32>
    %c1_i32_101 = arith.constant 1 : i32
    %558 = vector.broadcast %c1_i32_101 : i32 to vector<2x32xi32>
    %559 = arith.cmpi eq, %30, %558 : vector<2x32xi32>
    %cst_102 = arith.constant 0.000000e+00 : f32
    %560 = vector.shape_cast %557 : vector<1x32xf32> to vector<1x32xf32>
    %561 = vector.broadcast %560 : vector<1x32xf32> to vector<2x32xf32>
    %562 = vector.broadcast %cst_102 : f32 to vector<2x32xf32>
    %563 = arith.select %559, %561, %562 : vector<2x32xi1>, vector<2x32xf32>
    %564 = arith.addf %541, %563 : vector<2x32xf32>
    %c0_103 = arith.constant 0 : index
    %c0_104 = arith.constant 0 : index
    %565 = vector.load %arg4[%c0_103, %c0_104] : memref<2x64xf32, #tpu.memory_space<vmem>>, vector<2x32xf32>
    tpu.vector_store %arg4[%c0_103, %c0_104], %564 {strides = array<i32>} : memref<2x64xf32, #tpu.memory_space<vmem>>, vector<2x32xf32>,
    %c0_105 = arith.constant 0 : index
    %c32 = arith.constant 32 : index
    %566 = vector.load %arg4[%c0_105, %c32] : memref<2x64xf32, #tpu.memory_space<vmem>>, vector<2x32xf32>
    tpu.vector_store %arg4[%c0_105, %c32], %516 {strides = array<i32>} : memref<2x64xf32, #tpu.memory_space<vmem>>, vector<2x32xf32>,
    %c0_106 = arith.constant 0 : index
    %c0_107 = arith.constant 0 : index
    %567 = vector.load %arg4[%c0_106, %c0_107] : memref<2x64xf32, #tpu.memory_space<vmem>>, vector<2x64xf32>
    %c0_108 = arith.constant 0 : index
    %c0_109 = arith.constant 0 : index
    %568 = vector.load %arg3[%c0_108, %c0_109] : memref<128x32xf32, #tpu.memory_space<vmem>>, vector<64x32xf32>
    %c64 = arith.constant 64 : index
    %c0_110 = arith.constant 0 : index
    %569 = vector.load %arg3[%c64, %c0_110] : memref<128x32xf32, #tpu.memory_space<vmem>>, vector<1x32xf32>
    %c72 = arith.constant 72 : index
    %c0_111 = arith.constant 0 : index
    %570 = vector.load %arg3[%c72, %c0_111] : memref<128x32xf32, #tpu.memory_space<vmem>>, vector<32x16xf32>
    %c104 = arith.constant 104 : index
    %c0_112 = arith.constant 0 : index
    %571 = vector.load %arg3[%c104, %c0_112] : memref<128x32xf32, #tpu.memory_space<vmem>>, vector<1x16xf32>
    %c112 = arith.constant 112 : index
    %c0_113 = arith.constant 0 : index
    %572 = vector.load %arg3[%c112, %c0_113] : memref<128x32xf32, #tpu.memory_space<vmem>>, vector<1x16xf32>
    %c120 = arith.constant 120 : index
    %c0_114 = arith.constant 0 : index
    %573 = vector.load %arg3[%c120, %c0_114] : memref<128x32xf32, #tpu.memory_space<vmem>>, vector<1x1xf32>
    %cst_115 = arith.constant dense<0.000000e+00> : vector<2x32xf32>
    %574 = tpu.matmul %567, %568, %cst_115 {dimension_numbers = #tpu.dot_dimension_numbers<[1], [0], [0], [1], [0, 0, 1, 1], [], []>} : vector<2x64xf32>, vector<64x32xf32>, vector<2x32xf32> -> vector<2x32xf32>
    %575 = vector.broadcast %569 : vector<1x32xf32> to vector<2x32xf32>
    %576 = arith.addf %574, %575 : vector<2x32xf32>
    %cst_116 = arith.constant 0.000000e+00 : f32
    %577 = vector.broadcast %cst_116 : f32 to vector<2x32xf32>
    %578 = arith.maximumf %576, %577 : vector<2x32xf32>
    %cst_117 = arith.constant dense<0.000000e+00> : vector<2x16xf32>
    %579 = tpu.matmul %578, %570, %cst_117 {dimension_numbers = #tpu.dot_dimension_numbers<[1], [0], [0], [1], [0, 0, 1, 1], [], []>} : vector<2x32xf32>, vector<32x16xf32>, vector<2x16xf32> -> vector<2x16xf32>
    %580 = vector.broadcast %571 : vector<1x16xf32> to vector<2x16xf32>
    %581 = arith.addf %579, %580 : vector<2x16xf32>
    %cst_118 = arith.constant 0.000000e+00 : f32
    %582 = vector.broadcast %cst_118 : f32 to vector<2x16xf32>
    %583 = arith.maximumf %581, %582 : vector<2x16xf32>
    %584 = vector.broadcast %572 : vector<1x16xf32> to vector<2x16xf32>
    %585 = arith.mulf %583, %584 : vector<2x16xf32>
    %cst_119 = arith.constant dense<0.000000e+00> : vector<2xf32>
    %586 = vector.multi_reduction <add>, %585, %cst_119 [1] : vector<2x16xf32> to vector<2xf32>
    %587 = vector.shape_cast %586 : vector<2xf32> to vector<2x1xf32>
    %588 = vector.broadcast %573 : vector<1x1xf32> to vector<2x1xf32>
    %589 = arith.addf %587, %588 : vector<2x1xf32>
    %590 = arith.negf %589 : vector<2x1xf32>
    %591 = math.exp %590 : vector<2x1xf32>
    %cst_120 = arith.constant 1.000000e+00 : f32
    %592 = vector.broadcast %cst_120 : f32 to vector<2x1xf32>
    %593 = arith.addf %592, %591 : vector<2x1xf32>
    %594 = arith.divf %592, %593 : vector<2x1xf32>
    %c0_121 = arith.constant 0 : index
    %c0_122 = arith.constant 0 : index
    %595 = vector.load %arg5[%c0_121, %c0_122] : memref<2x1xf32, #tpu.memory_space<vmem>>, vector<2x1xf32>
    tpu.vector_store %arg5[%c0_121, %c0_122], %594 {strides = array<i32>} : memref<2x1xf32, #tpu.memory_space<vmem>>, vector<2x1xf32>,
    return
  }
}

</mosaic_0001>

<llo_original>
// kernel: net_forward.1
$region0: #{net_forward.1}
  #allocation0 [shape = 'u32[]', space=smem, size = 0x4, offset = 0x4, fixed_abs, tag = 'smem constant byte address 0x4 - core index']
  #allocation1 [shape = 'u32[144,128]{1,0:T(1,128)}', space=vmem, size = 0x12000, scoped, tag = 'internal scratch']
  %s0 = inlined_call_operand.vmem [shape: f32[8,32], index: 0, kind: input, shape index: {}]
  %s1 = inlined_call_operand.vmem [shape: f32[9,8], index: 1, kind: input, shape index: {}]
  %s2 = inlined_call_operand.vmem [shape: f32[3,80,64], index: 2, kind: input, shape index: {}]
  %s3 = inlined_call_operand.vmem [shape: f32[128,32], index: 3, kind: input, shape index: {}]
  %s4 = inlined_call_operand.hbm [shape: f32[2,64], index: 4, kind: output, shape index: {0}]
  %s5 = inlined_call_operand.vmem [shape: f32[2,1], index: 5, kind: output, shape index: {1}]
  %6 = xla_tuple %s4, %s5
  %s7 = sld [smem:[#allocation0]]
  $region34: #{net_forward.1} parent=0
    _
  %s9 = ssub.s32 1, %s7
  %s10 = scalar_select 0, %s9, %s7
  $region1: #{net_forward.1} parent=0
    #allocation2 [shape = 'u8[1024]{0}', space=vmem, size = 0x400, scoped, tag = 'output window, operand 0, single buffered']
    #allocation3 [shape = 's32[1]{0}', space=sflag, size = 0x4, scoped, tag = 'scoped memory for net_forward.1']
    %11 = vsyncpa [#allocation3], 0
    // Predicated region
    $region2: #{net_forward.1} parent=1 // pred_check
      _
    $region3: #{net_forward.1} parent=1 // pred_check_branch
      %13 = sbr.rel (0) target = $region5
    $region4: #{net_forward.1} parent=1 // pred_region
      _
    $region5: #{net_forward.1} parent=1 // pred_fallthru
      _
    // Predicated region
    $region6: #{net_forward.1} parent=1 // pred_check
      _
    $region7: #{net_forward.1} parent=1 // pred_check_branch
      %15 = sbr.rel (0) target = $region9
    $region8: #{net_forward.1} parent=1 // pred_region
      _
    $region9: #{net_forward.1} parent=1 // pred_fallthru
      _
    // Predicated region
    $region10: #{net_forward.1} parent=1 // pred_check
      _
    $region11: #{net_forward.1} parent=1 // pred_check_branch
      %17 = sbr.rel (0) target = $region13
    $region12: #{net_forward.1} parent=1 // pred_region
      _
    $region13: #{net_forward.1} parent=1 // pred_fallthru
      _
    // Predicated region
    $region14: #{net_forward.1} parent=1 // pred_check
      _
    $region15: #{net_forward.1} parent=1 // pred_check_branch
      %19 = sbr.rel (0) target = $region17
    $region16: #{net_forward.1} parent=1 // pred_region
      _
    $region17: #{net_forward.1} parent=1 // pred_fallthru
      _
    %v20 = vld [vmem:[%s0] sm:$0xff]
    %v21 = vld [vmem:[%s1] sm:$0xff]
    %v22 = vld [vmem:[%s1 + $0x8] sm:$0x1]
    %v23 = vlaneseq
    %v24 = vshrl.u32 %v23, 7
    %v25 = vlaneseq
    %v26 = vand.u32 %v25, 127
    %vm27 = vcmp.eq.s32.totalorder %v24, %v26
    %v28 = vsel %vm27, 1, 0
    %v29 = vcvt.s32.f32 %v28
    %vm30 = vcmp.lt.s32.totalorder %v26, %v24
    %v31 = vlaneseq
    %v32 = vshrl.u32 %v31, 7
    %v33 = vsub.s32 0, %v32
    %v34 = vrot.slane %v22, %v33
    %v35 = vmul.f32 %v34, %v29
    %vm36 = vcmask 64512
    %v37 = vsel %vm36, %v35, 0.0
    %38 = vadd.xlane.f32.xlu0 %v37
    %v39 = vpop.xlane.xlu0 %38
    %vm40 = vcmp.eq.f32.partialorder %v39, %v34
    %v41 = vsel %vm40, 1, 0
    %v42 = vcvt.s32.f32 %v41
    %v43 = vcvt.s32.f32 %v26
    %vm44 = vcmp.eq.f32.partialorder %v39, %v43
    %v45 = vsel %vm44, 1, 0
    %v46 = vcvt.s32.f32 %v45
    %v47 = vcvt.s32.f32 %v24
    %vm48 = vcmp.eq.f32.partialorder %v47, %v34
    %v49 = vsel %vm48, 1, 0
    %v50 = vcvt.s32.f32 %v49
    %v51 = vld [vmem:[%s2] sm:$0xff]
    %v52 = vld [vmem:[%s2 + $0x8] sm:$0xff]
    %v53 = vld [vmem:[%s2 + $0x10] sm:$0xff]
    %v54 = vld [vmem:[%s2 + $0x18] sm:$0xff]
    %v55 = vld [vmem:[%s2 + $0x20] sm:$0xff]
    %v56 = vld [vmem:[%s2 + $0x28] sm:$0xff]
    %v57 = vld [vmem:[%s2 + $0x30] sm:$0xff]
    %v58 = vld [vmem:[%s2 + $0x38] sm:$0xff]
    %v59 = vld [vmem:[%s2 + $0x40] sm:$0xff]
    %v60 = vld [vmem:[%s2 + $0x48] sm:$0xff]
    %vm61 = vcmask 261120
    %v63 = vsel %vm61, %v20, 0
    %65 = vmatprep.subr.mxu0 0.0
    %66 = vmatpush1.msra.mxu0 %v51
    %67 = vmatprep.subr.mxu0 0.0
    %68 = vmatpush1.msra.mxu0 %v52
    %69 = vmatprep.subr.mxu0 0.0
    %70 = vmatpush1.msra.mxu0 %v53
    %71 = vmatprep.subr.mxu0 0.0
    %72 = vmatpush1.msra.mxu0 %v54
    %73 = vmatprep.subr.mxu0 0.0
    %74 = vmatpush1.msra.mxu0 0.0
    %75 = vmatprep.subr.mxu0 0.0
    %76 = vmatpush1.msra.mxu0 0.0
    %77 = vmatprep.subr.mxu0 0.0
    %78 = vmatpush1.msra.mxu0 0.0
    %79 = vmatprep.subr.mxu0 0.0
    %80 = vmatpush1.msra.mxu0 0.0
    %81 = vmatprep.subr.mxu0 0.0
    %82 = vmatpush1.msra.mxu0 0.0
    %83 = vmatprep.subr.mxu0 0.0
    %84 = vmatpush1.msra.mxu0 0.0
    %85 = vmatprep.subr.mxu0 0.0
    %86 = vmatpush1.msra.mxu0 0.0
    %87 = vmatprep.subr.mxu0 0.0
    %88 = vmatpush1.msra.mxu0 0.0
    %89 = vmatprep.subr.mxu0 0.0
    %90 = vmatpush1.msra.mxu0 0.0
    %91 = vmatprep.subr.mxu0 0.0
    %92 = vmatpush1.msra.mxu0 0.0
    %93 = vmatprep.subr.mxu0 0.0
    %94 = vmatpush1.msra.mxu0 0.0
    %95 = vmatprep.subr.mxu0 0.0
    %96 = vmatpush1.msra.mxu0 0.0
    %97 = vmatprep.subr.mxu0 0.0
    %98 = vmatpush1.msra.mxu0 0.0
    %99 = vmatprep.subr.mxu0 0.0
    %100 = vmatpush1.msra.mxu0 0.0
    %101 = vmatprep.subr.mxu0 0.0
    %102 = vmatpush1.msra.mxu0 0.0
    %103 = vmatprep.subr.mxu0 0.0
    %104 = vmatpush1.msra.mxu0 0.0
    %105 = vmatprep.subr.mxu0 0.0
    %106 = vmatpush1.msra.mxu0 0.0
    %107 = vmatprep.subr.mxu0 0.0
    %108 = vmatpush1.msra.mxu0 0.0
    %109 = vmatprep.subr.mxu0 0.0
    %110 = vmatpush1.msra.mxu0 0.0
    %111 = vmatprep.subr.mxu0 0.0
    %112 = vmatpush1.msra.mxu0 0.0
    %113 = vmatprep.subr.mxu0 0.0
    %114 = vmatpush1.msra.mxu0 0.0
    %115 = vmatprep.subr.mxu0 0.0
    %116 = vmatpush1.msra.mxu0 0.0
    %117 = vmatprep.subr.mxu0 0.0
    %118 = vmatpush1.msra.mxu0 0.0
    %119 = vmatprep.subr.mxu0 0.0
    %120 = vmatpush1.msra.mxu0 0.0
    %121 = vmatprep.subr.mxu0 0.0
    %122 = vmatpush1.msra.mxu0 0.0
    %123 = vmatprep.subr.mxu0 0.0
    %124 = vmatpush1.msra.mxu0 0.0
    %125 = vmatprep.subr.mxu0 0.0
    %126 = vmatpush1.msra.mxu0 0.0
    %127 = vmatprep.subr.mxu0 0.0
    %128 = vmatpush1.msra.mxu0 0.0
    %129 = vmatprep.mubr.f32.mxu0 0.0
    %130 = vmatmul.mubr.f32.gmra.mrb[0].mxu0 %v63
    %v131 = vpop.f32.mrb[0].mxu0
    %v132 = vadd.f32 0.0, %v131
    %v133 = vpop.f32.mrb[0].mxu0
    %134 = vdwg.mxu0
    %v135 = vlaneseq
    %v136 = vshrl.u32 %v135, 7
    %v137 = vsub.s32 0, %v136
    %v138 = vrot.slane %v59, %v137
    %v139 = vadd.f32 %v132, %v138
    %v140 = vmax.f32 %v139, 0.0
    %v141 = vmax.f32 %v21, %v29
    %v142 = vsub.f32 %v141, 1.0
    %v143 = vmul.f32 %v142, 1e+30
    %v144 = vlaneseq
    %v145 = vshrl.u32 %v144, 7
    %v146 = vsub.s32 0, %v145
    %v147 = vrot.slane %v140, %v146
    %149 = vset.pattern.permute.xlu0 0
    %150 = vperm.xlu0 %149, %v143
    %v151 = vpop.permute.xlu0 %150
    %v153 = vadd.f32 %v147, %v151
    %v154 = vlaneseq
    %v155 = vshrl.u32 %v154, 7
    %v156 = vsub.s32 1, %v155
    %v157 = vrot.slane %v140, %v156
    %158 = vset.pattern.permute.xlu0 1
    %159 = vperm.xlu0 %158, %v143
    %v160 = vpop.permute.xlu0 %159
    %v162 = vadd.f32 %v157, %v160
    %v163 = vmax.f32 %v153, %v162
    %v164 = vlaneseq
    %v165 = vshrl.u32 %v164, 7
    %v166 = vsub.s32 2, %v165
    %v167 = vrot.slane %v140, %v166
    %168 = vset.pattern.permute.xlu0 2
    %169 = vperm.xlu0 %168, %v143
    %v170 = vpop.permute.xlu0 %169
    %v172 = vadd.f32 %v167, %v170
    %v173 = vmax.f32 %v163, %v172
    %v174 = vlaneseq
    %v175 = vshrl.u32 %v174, 7
    %v176 = vsub.s32 3, %v175
    %v177 = vrot.slane %v140, %v176
    %178 = vset.pattern.permute.xlu0 3
    %179 = vperm.xlu0 %178, %v143
    %v180 = vpop.permute.xlu0 %179
    %v182 = vadd.f32 %v177, %v180
    %v183 = vmax.f32 %v173, %v182
    %v184 = vlaneseq
    %v185 = vshrl.u32 %v184, 7
    %v186 = vsub.s32 4, %v185
    %v187 = vrot.slane %v140, %v186
    %188 = vset.pattern.permute.xlu0 4
    %189 = vperm.xlu0 %188, %v143
    %v190 = vpop.permute.xlu0 %189
    %v192 = vadd.f32 %v187, %v190
    %v193 = vmax.f32 %v183, %v192
    %v194 = vlaneseq
    %v195 = vshrl.u32 %v194, 7
    %v196 = vsub.s32 5, %v195
    %v197 = vrot.slane %v140, %v196
    %198 = vset.pattern.permute.xlu0 5
    %199 = vperm.xlu0 %198, %v143
    %v200 = vpop.permute.xlu0 %199
    %v202 = vadd.f32 %v197, %v200
    %v203 = vmax.f32 %v193, %v202
    %v204 = vlaneseq
    %v205 = vshrl.u32 %v204, 7
    %v206 = vsub.s32 6, %v205
    %v207 = vrot.slane %v140, %v206
    %208 = vset.pattern.permute.xlu0 6
    %209 = vperm.xlu0 %208, %v143
    %v210 = vpop.permute.xlu0 %209
    %v212 = vadd.f32 %v207, %v210
    %v213 = vmax.f32 %v203, %v212
    %v214 = vlaneseq
    %v215 = vshrl.u32 %v214, 7
    %v216 = vsub.s32 7, %v215
    %v217 = vrot.slane %v140, %v216
    %218 = vset.pattern.permute.xlu0 7
    %219 = vperm.xlu0 %218, %v143
    %v220 = vpop.permute.xlu0 %219
    %v222 = vadd.f32 %v217, %v220
    %v223 = vmax.f32 %v213, %v222
    %225 = vrot.lane.b32.xlu0 %v132, 96
    %v226 = vpop.permute.xlu0 %225
    %v229 = vsel %vm61, %v223, 0
    %231 = vmatprep.subr.mxu0 0.0
    %232 = vmatpush1.msra.mxu0 %v55
    %233 = vmatprep.subr.mxu0 0.0
    %234 = vmatpush1.msra.mxu0 %v56
    %235 = vmatprep.subr.mxu0 0.0
    %236 = vmatpush1.msra.mxu0 %v57
    %237 = vmatprep.subr.mxu0 0.0
    %238 = vmatpush1.msra.mxu0 %v58
    %239 = vmatprep.subr.mxu0 0.0
    %240 = vmatpush1.msra.mxu0 0.0
    %241 = vmatprep.subr.mxu0 0.0
    %242 = vmatpush1.msra.mxu0 0.0
    %243 = vmatprep.subr.mxu0 0.0
    %244 = vmatpush1.msra.mxu0 0.0
    %245 = vmatprep.subr.mxu0 0.0
    %246 = vmatpush1.msra.mxu0 0.0
    %247 = vmatprep.subr.mxu0 0.0
    %248 = vmatpush1.msra.mxu0 0.0
    %249 = vmatprep.subr.mxu0 0.0
    %250 = vmatpush1.msra.mxu0 0.0
    %251 = vmatprep.subr.mxu0 0.0
    %252 = vmatpush1.msra.mxu0 0.0
    %253 = vmatprep.subr.mxu0 0.0
    %254 = vmatpush1.msra.mxu0 0.0
    %255 = vmatprep.subr.mxu0 0.0
    %256 = vmatpush1.msra.mxu0 0.0
    %257 = vmatprep.subr.mxu0 0.0
    %258 = vmatpush1.msra.mxu0 0.0
    %259 = vmatprep.subr.mxu0 0.0
    %260 = vmatpush1.msra.mxu0 0.0
    %261 = vmatprep.subr.mxu0 0.0
    %262 = vmatpush1.msra.mxu0 0.0
    %263 = vmatprep.subr.mxu0 0.0
    %264 = vmatpush1.msra.mxu0 0.0
    %265 = vmatprep.subr.mxu0 0.0
    %266 = vmatpush1.msra.mxu0 0.0
    %267 = vmatprep.subr.mxu0 0.0
    %268 = vmatpush1.msra.mxu0 0.0
    %269 = vmatprep.subr.mxu0 0.0
    %270 = vmatpush1.msra.mxu0 0.0
    %271 = vmatprep.subr.mxu0 0.0
    %272 = vmatpush1.msra.mxu0 0.0
    %273 = vmatprep.subr.mxu0 0.0
    %274 = vmatpush1.msra.mxu0 0.0
    %275 = vmatprep.subr.mxu0 0.0
    %276 = vmatpush1.msra.mxu0 0.0
    %277 = vmatprep.subr.mxu0 0.0
    %278 = vmatpush1.msra.mxu0 0.0
    %279 = vmatprep.subr.mxu0 0.0
    %280 = vmatpush1.msra.mxu0 0.0
    %281 = vmatprep.subr.mxu0 0.0
    %282 = vmatpush1.msra.mxu0 0.0
    %283 = vmatprep.subr.mxu0 0.0
    %284 = vmatpush1.msra.mxu0 0.0
    %285 = vmatprep.subr.mxu0 0.0
    %286 = vmatpush1.msra.mxu0 0.0
    %287 = vmatprep.subr.mxu0 0.0
    %288 = vmatpush1.msra.mxu0 0.0
    %289 = vmatprep.subr.mxu0 0.0
    %290 = vmatpush1.msra.mxu0 0.0
    %291 = vmatprep.subr.mxu0 0.0
    %292 = vmatpush1.msra.mxu0 0.0
    %293 = vmatprep.subr.mxu0 0.0
    %294 = vmatpush1.msra.mxu0 0.0
    %295 = vmatprep.mubr.f32.mxu0 0.0
    %296 = vmatmul.mubr.f32.gmra.mrb[0].mxu0 %v229
    %v297 = vpop.f32.mrb[0].mxu0
    %v298 = vadd.f32 %v226, %v297
    %v299 = vpop.f32.mrb[0].mxu0
    %300 = vdwg.mxu0
    %v301 = vmax.f32 %v298, 0.0
    %v302 = vlaneseq
    %v303 = vshrl.u32 %v302, 7
    %v304 = vsub.s32 0, %v303
    %v305 = vrot.slane %v60, %v304
    %v306 = vmul.f32 %v301, %v305
    %v307 = vsel %vm61, %v306, 0.0
    %308 = vadd.xlane.f32.xlu0 %v307
    %v309 = vpop.xlane.xlu0 %308
    %v310 = vmul.f32 %v309, %v29
    %v311 = vsel %vm36, %v310, 0.0
    %v312 = vrot.slane %v311, 4
    %v313 = vadd.f32 %v311, %v312
    %v314 = vrot.slane %v313, 2
    %v315 = vadd.f32 %v313, %v314
    %v316 = vrot.slane %v315, 1
    %v317 = vadd.f32 %v315, %v316
    %vm318 = vcmp.gt.f32.partialorder %v317, %v309
    %vm319 = vcmp.eq.f32.partialorder %v317, %v309
    %vm320 = vmand %vm319, %vm30
    %vm321 = vmor %vm318, %vm320
    %v322 = vsel %vm321, 1, 0
    %v323 = vcvt.s32.f32 %v322
    %v324 = vmul.f32 %v42, %v323
    %v325 = vsel %vm36, %v324, 0.0
    %326 = vadd.xlane.f32.xlu0 %v325
    %v327 = vpop.xlane.xlu0 %326
    %vm328 = vcmask 15360
    %v329 = vsel %vm328, %v46, 0.0
    %v330 = vrot.slane %v329, 4
    %v331 = vadd.f32 %v329, %v330
    %v332 = vrot.slane %v331, 2
    %v333 = vadd.f32 %v331, %v332
    %v334 = vrot.slane %v333, 1
    %v335 = vadd.f32 %v333, %v334
    %v336 = vmul.f32 %v335, 0.8
    %v337 = vceil.f32 %v336
    %v338 = vmul.f32 %v46, %v337
    %v339 = vsel %vm328, %v338, 0.0
    %340 = vadd.xlane.f32.xlu0 %v339
    %v341 = vpop.xlane.xlu0 %340
    %vm342 = vcmp.lt.f32.partialorder %v327, %v341
    %v343 = vsel %vm342, 1, 0
    %v344 = vcvt.s32.f32 %v343
    %v345 = vmul.f32 %v344, %v29
    %v346 = vsel %vm36, %v345, 0.0
    %v347 = vrot.slane %v346, 4
    %v348 = vadd.f32 %v346, %v347
    %v349 = vrot.slane %v348, 2
    %v350 = vadd.f32 %v348, %v349
    %v351 = vrot.slane %v350, 1
    %v352 = vadd.f32 %v350, %v351
    %v353 = vtanh.pop %v309
    %v354 = vmul.f32 %v301, %v353
    %v355 = vmul.f32 %v354, %v344
    %v356 = vmul.f32 %v21, %v344
    %v357 = vmul.f32 %v356, %v352
    %v358 = vmul.f32 %v50, %v352
    %vm359 = vcmask 58368
    %v360 = vsel %vm359, %v358, 0.0
    %361 = vadd.xlane.f32.xlu0 %v360
    %v362 = vpop.xlane.xlu0 %361
    %v364 = vsel %vm36, %v358, 0
    %366 = vmatprep.subr.mxu0 0.0
    %367 = vmatpush1.msra.mxu0 %v355
    %368 = vmatprep.subr.mxu0 0.0
    %369 = vmatpush1.msra.mxu0 0.0
    %370 = vmatprep.subr.mxu0 0.0
    %371 = vmatpush1.msra.mxu0 0.0
    %372 = vmatprep.subr.mxu0 0.0
    %373 = vmatpush1.msra.mxu0 0.0
    %374 = vmatprep.subr.mxu0 0.0
    %375 = vmatpush1.msra.mxu0 0.0
    %376 = vmatprep.subr.mxu0 0.0
    %377 = vmatpush1.msra.mxu0 0.0
    %378 = vmatprep.subr.mxu0 0.0
    %379 = vmatpush1.msra.mxu0 0.0
    %380 = vmatprep.subr.mxu0 0.0
    %381 = vmatpush1.msra.mxu0 0.0
    %382 = vmatprep.subr.mxu0 0.0
    %383 = vmatpush1.msra.mxu0 0.0
    %384 = vmatprep.subr.mxu0 0.0
    %385 = vmatpush1.msra.mxu0 0.0
    %386 = vmatprep.subr.mxu0 0.0
    %387 = vmatpush1.msra.mxu0 0.0
    %388 = vmatprep.subr.mxu0 0.0
    %389 = vmatpush1.msra.mxu0 0.0
    %390 = vmatprep.subr.mxu0 0.0
    %391 = vmatpush1.msra.mxu0 0.0
    %392 = vmatprep.subr.mxu0 0.0
    %393 = vmatpush1.msra.mxu0 0.0
    %394 = vmatprep.subr.mxu0 0.0
    %395 = vmatpush1.msra.mxu0 0.0
    %396 = vmatprep.subr.mxu0 0.0
    %397 = vmatpush1.msra.mxu0 0.0
    %398 = vmatprep.subr.mxu0 0.0
    %399 = vmatpush1.msra.mxu0 0.0
    %400 = vmatprep.subr.mxu0 0.0
    %401 = vmatpush1.msra.mxu0 0.0
    %402 = vmatprep.subr.mxu0 0.0
    %403 = vmatpush1.msra.mxu0 0.0
    %404 = vmatprep.subr.mxu0 0.0
    %405 = vmatpush1.msra.mxu0 0.0
    %406 = vmatprep.subr.mxu0 0.0
    %407 = vmatpush1.msra.mxu0 0.0
    %408 = vmatprep.subr.mxu0 0.0
    %409 = vmatpush1.msra.mxu0 0.0
    %410 = vmatprep.subr.mxu0 0.0
    %411 = vmatpush1.msra.mxu0 0.0
    %412 = vmatprep.subr.mxu0 0.0
    %413 = vmatpush1.msra.mxu0 0.0
    %414 = vmatprep.subr.mxu0 0.0
    %415 = vmatpush1.msra.mxu0 0.0
    %416 = vmatprep.subr.mxu0 0.0
    %417 = vmatpush1.msra.mxu0 0.0
    %418 = vmatprep.subr.mxu0 0.0
    %419 = vmatpush1.msra.mxu0 0.0
    %420 = vmatprep.subr.mxu0 0.0
    %421 = vmatpush1.msra.mxu0 0.0
    %422 = vmatprep.subr.mxu0 0.0
    %423 = vmatpush1.msra.mxu0 0.0
    %424 = vmatprep.subr.mxu0 0.0
    %425 = vmatpush1.msra.mxu0 0.0
    %426 = vmatprep.subr.mxu0 0.0
    %427 = vmatpush1.msra.mxu0 0.0
    %428 = vmatprep.subr.mxu0 0.0
    %429 = vmatpush1.msra.mxu0 0.0
    %430 = vmatprep.mubr.f32.mxu0 0.0
    %431 = vmatmul.mubr.f32.gmra.mrb[0].mxu0 %v364
    %v432 = vpop.f32.mrb[0].mxu0
    %v433 = vadd.f32 0.0, %v432
    %v434 = vpop.f32.mrb[0].mxu0
    %435 = vdwg.mxu0
    %v436 = vmax.f32 %v362, 1.0
    %v437 = vrcp.pop %v436
    %v438 = vmul.f32 %v433, %v437
    %v439 = vadd.f32 %v438, 0.0
    %v440 = vmul.f32 %v46, %v344
    %v441 = vsub.f32 %v440, 1.0
    %v442 = vmul.f32 %v441, 1e+30
    %444 = vset.pattern.permute.xlu0 0
    %445 = vperm.xlu0 %444, %v442
    %v446 = vpop.permute.xlu0 %445
    %v448 = vadd.f32 %v355, %v446
    %v449 = vsel %vm61, %v448, -inf
    %v450 = vrot.slane %v449, 4
    %v451 = vmax.f32 %v449, %v450
    %v452 = vrot.slane %v451, 2
    %v453 = vmax.f32 %v451, %v452
    %v454 = vrot.slane %v453, 1
    %v455 = vmax.f32 %v453, %v454
    %vm456 = vcmp.gt.f32.partialorder %v362, 0.0
    %v457 = vsel %vm456, 1, 0
    %vm458 = vcmp.eq.s32.totalorder %v457, 1
    %v459 = vsel %vm458, %v455, 0.0
    %vm460 = vcmp.eq.s32.totalorder %v24, 0
    %v461 = vlaneseq
    %v462 = vshrl.u32 %v461, 7
    %v463 = vsub.s32 0, %v462
    %v464 = vrot.slane %v459, %v463
    %v465 = vsel %vm460, %v464, 0.0
    %v466 = vadd.f32 %v465, 0.0
    %467 = vset.pattern.permute.xlu0 1
    %468 = vperm.xlu0 %467, %v442
    %v469 = vpop.permute.xlu0 %468
    %v471 = vadd.f32 %v355, %v469
    %v472 = vsel %vm61, %v471, -inf
    %v473 = vrot.slane %v472, 4
    %v474 = vmax.f32 %v472, %v473
    %v475 = vrot.slane %v474, 2
    %v476 = vmax.f32 %v474, %v475
    %v477 = vrot.slane %v476, 1
    %v478 = vmax.f32 %v476, %v477
    %v479 = vsel %vm458, %v478, 0.0
    %vm480 = vcmp.eq.s32.totalorder %v24, 1
    %v481 = vlaneseq
    %v482 = vshrl.u32 %v481, 7
    %v483 = vsub.s32 1, %v482
    %v484 = vrot.slane %v479, %v483
    %v485 = vsel %vm480, %v484, 0.0
    %v486 = vadd.f32 %v466, %v485
    %s487 = scalar_lea.vmem %s2, 80
    %v488 = vld [vmem:[%s487] sm:$0xff]
    %v489 = vld [vmem:[%s487 + $0x8] sm:$0xff]
    %v490 = vld [vmem:[%s487 + $0x10] sm:$0xff]
    %v491 = vld [vmem:[%s487 + $0x18] sm:$0xff]
    %v492 = vld [vmem:[%s487 + $0x20] sm:$0xff]
    %v493 = vld [vmem:[%s487 + $0x28] sm:$0xff]
    %v494 = vld [vmem:[%s487 + $0x30] sm:$0xff]
    %v495 = vld [vmem:[%s487 + $0x38] sm:$0xff]
    %v496 = vld [vmem:[%s487 + $0x40] sm:$0xff]
    %v497 = vld [vmem:[%s487 + $0x48] sm:$0xff]
    %v499 = vsel %vm61, %v355, 0
    %501 = vmatprep.subr.mxu0 0.0
    %502 = vmatpush1.msra.mxu0 %v488
    %503 = vmatprep.subr.mxu0 0.0
    %504 = vmatpush1.msra.mxu0 %v489
    %505 = vmatprep.subr.mxu0 0.0
    %506 = vmatpush1.msra.mxu0 %v490
    %507 = vmatprep.subr.mxu0 0.0
    %508 = vmatpush1.msra.mxu0 %v491
    %509 = vmatprep.subr.mxu0 0.0
    %510 = vmatpush1.msra.mxu0 0.0
    %511 = vmatprep.subr.mxu0 0.0
    %512 = vmatpush1.msra.mxu0 0.0
    %513 = vmatprep.subr.mxu0 0.0
    %514 = vmatpush1.msra.mxu0 0.0
    %515 = vmatprep.subr.mxu0 0.0
    %516 = vmatpush1.msra.mxu0 0.0
    %517 = vmatprep.subr.mxu0 0.0
    %518 = vmatpush1.msra.mxu0 0.0
    %519 = vmatprep.subr.mxu0 0.0
    %520 = vmatpush1.msra.mxu0 0.0
    %521 = vmatprep.subr.mxu0 0.0
    %522 = vmatpush1.msra.mxu0 0.0
    %523 = vmatprep.subr.mxu0 0.0
    %524 = vmatpush1.msra.mxu0 0.0
    %525 = vmatprep.subr.mxu0 0.0
    %526 = vmatpush1.msra.mxu0 0.0
    %527 = vmatprep.subr.mxu0 0.0
    %528 = vmatpush1.msra.mxu0 0.0
    %529 = vmatprep.subr.mxu0 0.0
    %530 = vmatpush1.msra.mxu0 0.0
    %531 = vmatprep.subr.mxu0 0.0
    %532 = vmatpush1.msra.mxu0 0.0
    %533 = vmatprep.subr.mxu0 0.0
    %534 = vmatpush1.msra.mxu0 0.0
    %535 = vmatprep.subr.mxu0 0.0
    %536 = vmatpush1.msra.mxu0 0.0
    %537 = vmatprep.subr.mxu0 0.0
    %538 = vmatpush1.msra.mxu0 0.0
    %539 = vmatprep.subr.mxu0 0.0
    %540 = vmatpush1.msra.mxu0 0.0
    %541 = vmatprep.subr.mxu0 0.0
    %542 = vmatpush1.msra.mxu0 0.0
    %543 = vmatprep.subr.mxu0 0.0
    %544 = vmatpush1.msra.mxu0 0.0
    %545 = vmatprep.subr.mxu0 0.0
    %546 = vmatpush1.msra.mxu0 0.0
    %547 = vmatprep.subr.mxu0 0.0
    %548 = vmatpush1.msra.mxu0 0.0
    %549 = vmatprep.subr.mxu0 0.0
    %550 = vmatpush1.msra.mxu0 0.0
    %551 = vmatprep.subr.mxu0 0.0
    %552 = vmatpush1.msra.mxu0 0.0
    %553 = vmatprep.subr.mxu0 0.0
    %554 = vmatpush1.msra.mxu0 0.0
    %555 = vmatprep.subr.mxu0 0.0
    %556 = vmatpush1.msra.mxu0 0.0
    %557 = vmatprep.subr.mxu0 0.0
    %558 = vmatpush1.msra.mxu0 0.0
    %559 = vmatprep.subr.mxu0 0.0
    %560 = vmatpush1.msra.mxu0 0.0
    %561 = vmatprep.subr.mxu0 0.0
    %562 = vmatpush1.msra.mxu0 0.0
    %563 = vmatprep.subr.mxu0 0.0
    %564 = vmatpush1.msra.mxu0 0.0
    %565 = vmatprep.mubr.f32.mxu0 0.0
    %566 = vmatmul.mubr.f32.gmra.mrb[0].mxu0 %v499
    %v567 = vpop.f32.mrb[0].mxu0
    %v568 = vadd.f32 0.0, %v567
    %v569 = vpop.f32.mrb[0].mxu0
    %570 = vdwg.mxu0
    %v571 = vlaneseq
    %v572 = vshrl.u32 %v571, 7
    %v573 = vsub.s32 0, %v572
    %v574 = vrot.slane %v496, %v573
    %v575 = vadd.f32 %v568, %v574
    %v576 = vmax.f32 %v575, 0.0
    %v577 = vmax.f32 %v357, %v29
    %v578 = vsub.f32 %v577, 1.0
    %v579 = vmul.f32 %v578, 1e+30
    %v580 = vlaneseq
    %v581 = vshrl.u32 %v580, 7
    %v582 = vsub.s32 0, %v581
    %v583 = vrot.slane %v576, %v582
    %585 = vset.pattern.permute.xlu0 0
    %586 = vperm.xlu0 %585, %v579
    %v587 = vpop.permute.xlu0 %586
    %v589 = vadd.f32 %v583, %v587
    %v590 = vlaneseq
    %v591 = vshrl.u32 %v590, 7
    %v592 = vsub.s32 1, %v591
    %v593 = vrot.slane %v576, %v592
    %594 = vset.pattern.permute.xlu0 1
    %595 = vperm.xlu0 %594, %v579
    %v596 = vpop.permute.xlu0 %595
    %v598 = vadd.f32 %v593, %v596
    %v599 = vmax.f32 %v589, %v598
    %v600 = vlaneseq
    %v601 = vshrl.u32 %v600, 7
    %v602 = vsub.s32 2, %v601
    %v603 = vrot.slane %v576, %v602
    %604 = vset.pattern.permute.xlu0 2
    %605 = vperm.xlu0 %604, %v579
    %v606 = vpop.permute.xlu0 %605
    %v608 = vadd.f32 %v603, %v606
    %v609 = vmax.f32 %v599, %v608
    %v610 = vlaneseq
    %v611 = vshrl.u32 %v610, 7
    %v612 = vsub.s32 3, %v611
    %v613 = vrot.slane %v576, %v612
    %614 = vset.pattern.permute.xlu0 3
    %615 = vperm.xlu0 %614, %v579
    %v616 = vpop.permute.xlu0 %615
    %v618 = vadd.f32 %v613, %v616
    %v619 = vmax.f32 %v609, %v618
    %v620 = vlaneseq
    %v621 = vshrl.u32 %v620, 7
    %v622 = vsub.s32 4, %v621
    %v623 = vrot.slane %v576, %v622
    %624 = vset.pattern.permute.xlu0 4
    %625 = vperm.xlu0 %624, %v579
    %v626 = vpop.permute.xlu0 %625
    %v628 = vadd.f32 %v623, %v626
    %v629 = vmax.f32 %v619, %v628
    %v630 = vlaneseq
    %v631 = vshrl.u32 %v630, 7
    %v632 = vsub.s32 5, %v631
    %v633 = vrot.slane %v576, %v632
    %634 = vset.pattern.permute.xlu0 5
    %635 = vperm.xlu0 %634, %v579
    %v636 = vpop.permute.xlu0 %635
    %v638 = vadd.f32 %v633, %v636
    %v639 = vmax.f32 %v629, %v638
    %v640 = vlaneseq
    %v641 = vshrl.u32 %v640, 7
    %v642 = vsub.s32 6, %v641
    %v643 = vrot.slane %v576, %v642
    %644 = vset.pattern.permute.xlu0 6
    %645 = vperm.xlu0 %644, %v579
    %v646 = vpop.permute.xlu0 %645
    %v648 = vadd.f32 %v643, %v646
    %v649 = vmax.f32 %v639, %v648
    %v650 = vlaneseq
    %v651 = vshrl.u32 %v650, 7
    %v652 = vsub.s32 7, %v651
    %v653 = vrot.slane %v576, %v652
    %654 = vset.pattern.permute.xlu0 7
    %655 = vperm.xlu0 %654, %v579
    %v656 = vpop.permute.xlu0 %655
    %v658 = vadd.f32 %v653, %v656
    %v659 = vmax.f32 %v649, %v658
    %661 = vrot.lane.b32.xlu0 %v568, 96
    %v662 = vpop.permute.xlu0 %661
    %v665 = vsel %vm61, %v659, 0
    %667 = vmatprep.subr.mxu0 0.0
    %668 = vmatpush1.msra.mxu0 %v492
    %669 = vmatprep.subr.mxu0 0.0
    %670 = vmatpush1.msra.mxu0 %v493
    %671 = vmatprep.subr.mxu0 0.0
    %672 = vmatpush1.msra.mxu0 %v494
    %673 = vmatprep.subr.mxu0 0.0
    %674 = vmatpush1.msra.mxu0 %v495
    %675 = vmatprep.subr.mxu0 0.0
    %676 = vmatpush1.msra.mxu0 0.0
    %677 = vmatprep.subr.mxu0 0.0
    %678 = vmatpush1.msra.mxu0 0.0
    %679 = vmatprep.subr.mxu0 0.0
    %680 = vmatpush1.msra.mxu0 0.0
    %681 = vmatprep.subr.mxu0 0.0
    %682 = vmatpush1.msra.mxu0 0.0
    %683 = vmatprep.subr.mxu0 0.0
    %684 = vmatpush1.msra.mxu0 0.0
    %685 = vmatprep.subr.mxu0 0.0
    %686 = vmatpush1.msra.mxu0 0.0
    %687 = vmatprep.subr.mxu0 0.0
    %688 = vmatpush1.msra.mxu0 0.0
    %689 = vmatprep.subr.mxu0 0.0
    %690 = vmatpush1.msra.mxu0 0.0
    %691 = vmatprep.subr.mxu0 0.0
    %692 = vmatpush1.msra.mxu0 0.0
    %693 = vmatprep.subr.mxu0 0.0
    %694 = vmatpush1.msra.mxu0 0.0
    %695 = vmatprep.subr.mxu0 0.0
    %696 = vmatpush1.msra.mxu0 0.0
    %697 = vmatprep.subr.mxu0 0.0
    %698 = vmatpush1.msra.mxu0 0.0
    %699 = vmatprep.subr.mxu0 0.0
    %700 = vmatpush1.msra.mxu0 0.0
    %701 = vmatprep.subr.mxu0 0.0
    %702 = vmatpush1.msra.mxu0 0.0
    %703 = vmatprep.subr.mxu0 0.0
    %704 = vmatpush1.msra.mxu0 0.0
    %705 = vmatprep.subr.mxu0 0.0
    %706 = vmatpush1.msra.mxu0 0.0
    %707 = vmatprep.subr.mxu0 0.0
    %708 = vmatpush1.msra.mxu0 0.0
    %709 = vmatprep.subr.mxu0 0.0
    %710 = vmatpush1.msra.mxu0 0.0
    %711 = vmatprep.subr.mxu0 0.0
    %712 = vmatpush1.msra.mxu0 0.0
    %713 = vmatprep.subr.mxu0 0.0
    %714 = vmatpush1.msra.mxu0 0.0
    %715 = vmatprep.subr.mxu0 0.0
    %716 = vmatpush1.msra.mxu0 0.0
    %717 = vmatprep.subr.mxu0 0.0
    %718 = vmatpush1.msra.mxu0 0.0
    %719 = vmatprep.subr.mxu0 0.0
    %720 = vmatpush1.msra.mxu0 0.0
    %721 = vmatprep.subr.mxu0 0.0
    %722 = vmatpush1.msra.mxu0 0.0
    %723 = vmatprep.subr.mxu0 0.0
    %724 = vmatpush1.msra.mxu0 0.0
    %725 = vmatprep.subr.mxu0 0.0
    %726 = vmatpush1.msra.mxu0 0.0
    %727 = vmatprep.subr.mxu0 0.0
    %728 = vmatpush1.msra.mxu0 0.0
    %729 = vmatprep.subr.mxu0 0.0
    %730 = vmatpush1.msra.mxu0 0.0
    %731 = vmatprep.mubr.f32.mxu0 0.0
    %732 = vmatmul.mubr.f32.gmra.mrb[0].mxu0 %v665
    %v733 = vpop.f32.mrb[0].mxu0
    %v734 = vadd.f32 %v662, %v733
    %v735 = vpop.f32.mrb[0].mxu0
    %736 = vdwg.mxu0
    %v737 = vmax.f32 %v734, 0.0
    %v738 = vlaneseq
    %v739 = vshrl.u32 %v738, 7
    %v740 = vsub.s32 0, %v739
    %v741 = vrot.slane %v497, %v740
    %v742 = vmul.f32 %v737, %v741
    %v743 = vsel %vm61, %v742, 0.0
    %744 = vadd.xlane.f32.xlu0 %v743
    %v745 = vpop.xlane.xlu0 %744
    %v746 = vmul.f32 %v745, %v29
    %v747 = vsel %vm36, %v746, 0.0
    %v748 = vrot.slane %v747, 4
    %v749 = vadd.f32 %v747, %v748
    %v750 = vrot.slane %v749, 2
    %v751 = vadd.f32 %v749, %v750
    %v752 = vrot.slane %v751, 1
    %v753 = vadd.f32 %v751, %v752
    %vm754 = vcmp.gt.f32.partialorder %v753, %v745
    %vm755 = vcmp.eq.f32.partialorder %v753, %v745
    %vm756 = vmand %vm755, %vm30
    %vm757 = vmor %vm754, %vm756
    %v758 = vsel %vm757, 1, 0
    %v759 = vcvt.s32.f32 %v758
    %v760 = vmul.f32 %v42, %v352
    %v761 = vmul.f32 %v760, %v759
    %v762 = vsel %vm36, %v761, 0.0
    %763 = vadd.xlane.f32.xlu0 %v762
    %v764 = vpop.xlane.xlu0 %763
    %v765 = vsel %vm328, %v440, 0.0
    %v766 = vrot.slane %v765, 4
    %v767 = vadd.f32 %v765, %v766
    %v768 = vrot.slane %v767, 2
    %v769 = vadd.f32 %v767, %v768
    %v770 = vrot.slane %v769, 1
    %v771 = vadd.f32 %v769, %v770
    %v772 = vmul.f32 %v771, 0.8
    %v773 = vceil.f32 %v772
    %v774 = vmul.f32 %v46, %v773
    %v775 = vsel %vm328, %v774, 0.0
    %776 = vadd.xlane.f32.xlu0 %v775
    %v777 = vpop.xlane.xlu0 %776
    %vm778 = vcmp.lt.f32.partialorder %v764, %v777
    %v779 = vsel %vm778, 1, 0
    %v780 = vcvt.s32.f32 %v779
    %v781 = vmul.f32 %v344, %v780
    %v782 = vmul.f32 %v781, %v29
    %v783 = vsel %vm36, %v782, 0.0
    %v784 = vrot.slane %v783, 4
    %v785 = vadd.f32 %v783, %v784
    %v786 = vrot.slane %v785, 2
    %v787 = vadd.f32 %v785, %v786
    %v788 = vrot.slane %v787, 1
    %v789 = vadd.f32 %v787, %v788
    %v790 = vtanh.pop %v745
    %v791 = vmul.f32 %v737, %v790
    %v792 = vmul.f32 %v791, %v781
    %v793 = vmul.f32 %v357, %v781
    %v794 = vmul.f32 %v793, %v789
    %v795 = vmul.f32 %v50, %v789
    %v796 = vsel %vm359, %v795, 0.0
    %797 = vadd.xlane.f32.xlu0 %v796
    %v798 = vpop.xlane.xlu0 %797
    %v800 = vsel %vm36, %v795, 0
    %802 = vmatprep.subr.mxu0 0.0
    %803 = vmatpush1.msra.mxu0 %v792
    %804 = vmatprep.subr.mxu0 0.0
    %805 = vmatpush1.msra.mxu0 0.0
    %806 = vmatprep.subr.mxu0 0.0
    %807 = vmatpush1.msra.mxu0 0.0
    %808 = vmatprep.subr.mxu0 0.0
    %809 = vmatpush1.msra.mxu0 0.0
    %810 = vmatprep.subr.mxu0 0.0
    %811 = vmatpush1.msra.mxu0 0.0
    %812 = vmatprep.subr.mxu0 0.0
    %813 = vmatpush1.msra.mxu0 0.0
    %814 = vmatprep.subr.mxu0 0.0
    %815 = vmatpush1.msra.mxu0 0.0
    %816 = vmatprep.subr.mxu0 0.0
    %817 = vmatpush1.msra.mxu0 0.0
    %818 = vmatprep.subr.mxu0 0.0
    %819 = vmatpush1.msra.mxu0 0.0
    %820 = vmatprep.subr.mxu0 0.0
    %821 = vmatpush1.msra.mxu0 0.0
    %822 = vmatprep.subr.mxu0 0.0
    %823 = vmatpush1.msra.mxu0 0.0
    %824 = vmatprep.subr.mxu0 0.0
    %825 = vmatpush1.msra.mxu0 0.0
    %826 = vmatprep.subr.mxu0 0.0
    %827 = vmatpush1.msra.mxu0 0.0
    %828 = vmatprep.subr.mxu0 0.0
    %829 = vmatpush1.msra.mxu0 0.0
    %830 = vmatprep.subr.mxu0 0.0
    %831 = vmatpush1.msra.mxu0 0.0
    %832 = vmatprep.subr.mxu0 0.0
    %833 = vmatpush1.msra.mxu0 0.0
    %834 = vmatprep.subr.mxu0 0.0
    %835 = vmatpush1.msra.mxu0 0.0
    %836 = vmatprep.subr.mxu0 0.0
    %837 = vmatpush1.msra.mxu0 0.0
    %838 = vmatprep.subr.mxu0 0.0
    %839 = vmatpush1.msra.mxu0 0.0
    %840 = vmatprep.subr.mxu0 0.0
    %841 = vmatpush1.msra.mxu0 0.0
    %842 = vmatprep.subr.mxu0 0.0
    %843 = vmatpush1.msra.mxu0 0.0
    %844 = vmatprep.subr.mxu0 0.0
    %845 = vmatpush1.msra.mxu0 0.0
    %846 = vmatprep.subr.mxu0 0.0
    %847 = vmatpush1.msra.mxu0 0.0
    %848 = vmatprep.subr.mxu0 0.0
    %849 = vmatpush1.msra.mxu0 0.0
    %850 = vmatprep.subr.mxu0 0.0
    %851 = vmatpush1.msra.mxu0 0.0
    %852 = vmatprep.subr.mxu0 0.0
    %853 = vmatpush1.msra.mxu0 0.0
    %854 = vmatprep.subr.mxu0 0.0
    %855 = vmatpush1.msra.mxu0 0.0
    %856 = vmatprep.subr.mxu0 0.0
    %857 = vmatpush1.msra.mxu0 0.0
    %858 = vmatprep.subr.mxu0 0.0
    %859 = vmatpush1.msra.mxu0 0.0
    %860 = vmatprep.subr.mxu0 0.0
    %861 = vmatpush1.msra.mxu0 0.0
    %862 = vmatprep.subr.mxu0 0.0
    %863 = vmatpush1.msra.mxu0 0.0
    %864 = vmatprep.subr.mxu0 0.0
    %865 = vmatpush1.msra.mxu0 0.0
    %866 = vmatprep.mubr.f32.mxu0 0.0
    %867 = vmatmul.mubr.f32.gmra.mrb[0].mxu0 %v800
    %v868 = vpop.f32.mrb[0].mxu0
    %v869 = vadd.f32 0.0, %v868
    %v870 = vpop.f32.mrb[0].mxu0
    %871 = vdwg.mxu0
    %v872 = vmax.f32 %v798, 1.0
    %v873 = vrcp.pop %v872
    %v874 = vmul.f32 %v869, %v873
    %v875 = vadd.f32 %v439, %v874
    %v876 = vmul.f32 %v46, %v781
    %v877 = vsub.f32 %v876, 1.0
    %v878 = vmul.f32 %v877, 1e+30
    %880 = vset.pattern.permute.xlu0 0
    %881 = vperm.xlu0 %880, %v878
    %v882 = vpop.permute.xlu0 %881
    %v884 = vadd.f32 %v792, %v882
    %v885 = vsel %vm61, %v884, -inf
    %v886 = vrot.slane %v885, 4
    %v887 = vmax.f32 %v885, %v886
    %v888 = vrot.slane %v887, 2
    %v889 = vmax.f32 %v887, %v888
    %v890 = vrot.slane %v889, 1
    %v891 = vmax.f32 %v889, %v890
    %vm892 = vcmp.gt.f32.partialorder %v798, 0.0
    %v893 = vsel %vm892, 1, 0
    %vm894 = vcmp.eq.s32.totalorder %v893, 1
    %v895 = vsel %vm894, %v891, 0.0
    %v896 = vlaneseq
    %v897 = vshrl.u32 %v896, 7
    %v898 = vsub.s32 0, %v897
    %v899 = vrot.slane %v895, %v898
    %v900 = vsel %vm460, %v899, 0.0
    %v901 = vadd.f32 %v486, %v900
    %902 = vset.pattern.permute.xlu0 1
    %903 = vperm.xlu0 %902, %v878
    %v904 = vpop.permute.xlu0 %903
    %v906 = vadd.f32 %v792, %v904
    %v907 = vsel %vm61, %v906, -inf
    %v908 = vrot.slane %v907, 4
    %v909 = vmax.f32 %v907, %v908
    %v910 = vrot.slane %v909, 2
    %v911 = vmax.f32 %v909, %v910
    %v912 = vrot.slane %v911, 1
    %v913 = vmax.f32 %v911, %v912
    %v914 = vsel %vm894, %v913, 0.0
    %v915 = vlaneseq
    %v916 = vshrl.u32 %v915, 7
    %v917 = vsub.s32 1, %v916
    %v918 = vrot.slane %v914, %v917
    %v919 = vsel %vm480, %v918, 0.0
    %v920 = vadd.f32 %v901, %v919
    %s921 = scalar_lea.vmem %s2, 160
    %v922 = vld [vmem:[%s921] sm:$0xff]
    %v923 = vld [vmem:[%s921 + $0x8] sm:$0xff]
    %v924 = vld [vmem:[%s921 + $0x10] sm:$0xff]
    %v925 = vld [vmem:[%s921 + $0x18] sm:$0xff]
    %v926 = vld [vmem:[%s921 + $0x20] sm:$0xff]
    %v927 = vld [vmem:[%s921 + $0x28] sm:$0xff]
    %v928 = vld [vmem:[%s921 + $0x30] sm:$0xff]
    %v929 = vld [vmem:[%s921 + $0x38] sm:$0xff]
    %v930 = vld [vmem:[%s921 + $0x40] sm:$0xff]
    %v931 = vld [vmem:[%s921 + $0x48] sm:$0xff]
    %v933 = vsel %vm61, %v792, 0
    %935 = vmatprep.subr.mxu0 0.0
    %936 = vmatpush1.msra.mxu0 %v922
    %937 = vmatprep.subr.mxu0 0.0
    %938 = vmatpush1.msra.mxu0 %v923
    %939 = vmatprep.subr.mxu0 0.0
    %940 = vmatpush1.msra.mxu0 %v924
    %941 = vmatprep.subr.mxu0 0.0
    %942 = vmatpush1.msra.mxu0 %v925
    %943 = vmatprep.subr.mxu0 0.0
    %944 = vmatpush1.msra.mxu0 0.0
    %945 = vmatprep.subr.mxu0 0.0
    %946 = vmatpush1.msra.mxu0 0.0
    %947 = vmatprep.subr.mxu0 0.0
    %948 = vmatpush1.msra.mxu0 0.0
    %949 = vmatprep.subr.mxu0 0.0
    %950 = vmatpush1.msra.mxu0 0.0
    %951 = vmatprep.subr.mxu0 0.0
    %952 = vmatpush1.msra.mxu0 0.0
    %953 = vmatprep.subr.mxu0 0.0
    %954 = vmatpush1.msra.mxu0 0.0
    %955 = vmatprep.subr.mxu0 0.0
    %956 = vmatpush1.msra.mxu0 0.0
    %957 = vmatprep.subr.mxu0 0.0
    %958 = vmatpush1.msra.mxu0 0.0
    %959 = vmatprep.subr.mxu0 0.0
    %960 = vmatpush1.msra.mxu0 0.0
    %961 = vmatprep.subr.mxu0 0.0
    %962 = vmatpush1.msra.mxu0 0.0
    %963 = vmatprep.subr.mxu0 0.0
    %964 = vmatpush1.msra.mxu0 0.0
    %965 = vmatprep.subr.mxu0 0.0
    %966 = vmatpush1.msra.mxu0 0.0
    %967 = vmatprep.subr.mxu0 0.0
    %968 = vmatpush1.msra.mxu0 0.0
    %969 = vmatprep.subr.mxu0 0.0
    %970 = vmatpush1.msra.mxu0 0.0
    %971 = vmatprep.subr.mxu0 0.0
    %972 = vmatpush1.msra.mxu0 0.0
    %973 = vmatprep.subr.mxu0 0.0
    %974 = vmatpush1.msra.mxu0 0.0
    %975 = vmatprep.subr.mxu0 0.0
    %976 = vmatpush1.msra.mxu0 0.0
    %977 = vmatprep.subr.mxu0 0.0
    %978 = vmatpush1.msra.mxu0 0.0
    %979 = vmatprep.subr.mxu0 0.0
    %980 = vmatpush1.msra.mxu0 0.0
    %981 = vmatprep.subr.mxu0 0.0
    %982 = vmatpush1.msra.mxu0 0.0
    %983 = vmatprep.subr.mxu0 0.0
    %984 = vmatpush1.msra.mxu0 0.0
    %985 = vmatprep.subr.mxu0 0.0
    %986 = vmatpush1.msra.mxu0 0.0
    %987 = vmatprep.subr.mxu0 0.0
    %988 = vmatpush1.msra.mxu0 0.0
    %989 = vmatprep.subr.mxu0 0.0
    %990 = vmatpush1.msra.mxu0 0.0
    %991 = vmatprep.subr.mxu0 0.0
    %992 = vmatpush1.msra.mxu0 0.0
    %993 = vmatprep.subr.mxu0 0.0
    %994 = vmatpush1.msra.mxu0 0.0
    %995 = vmatprep.subr.mxu0 0.0
    %996 = vmatpush1.msra.mxu0 0.0
    %997 = vmatprep.subr.mxu0 0.0
    %998 = vmatpush1.msra.mxu0 0.0
    %999 = vmatprep.mubr.f32.mxu0 0.0
    %1000 = vmatmul.mubr.f32.gmra.mrb[0].mxu0 %v933
    %v1001 = vpop.f32.mrb[0].mxu0
    %v1002 = vadd.f32 0.0, %v1001
    %v1003 = vpop.f32.mrb[0].mxu0
    %1004 = vdwg.mxu0
    %v1005 = vlaneseq
    %v1006 = vshrl.u32 %v1005, 7
    %v1007 = vsub.s32 0, %v1006
    %v1008 = vrot.slane %v930, %v1007
    %v1009 = vadd.f32 %v1002, %v1008
    %v1010 = vmax.f32 %v1009, 0.0
    %v1011 = vmax.f32 %v794, %v29
    %v1012 = vsub.f32 %v1011, 1.0
    %v1013 = vmul.f32 %v1012, 1e+30
    %v1014 = vlaneseq
    %v1015 = vshrl.u32 %v1014, 7
    %v1016 = vsub.s32 0, %v1015
    %v1017 = vrot.slane %v1010, %v1016
    %1019 = vset.pattern.permute.xlu0 0
    %1020 = vperm.xlu0 %1019, %v1013
    %v1021 = vpop.permute.xlu0 %1020
    %v1023 = vadd.f32 %v1017, %v1021
    %v1024 = vlaneseq
    %v1025 = vshrl.u32 %v1024, 7
    %v1026 = vsub.s32 1, %v1025
    %v1027 = vrot.slane %v1010, %v1026
    %1028 = vset.pattern.permute.xlu0 1
    %1029 = vperm.xlu0 %1028, %v1013
    %v1030 = vpop.permute.xlu0 %1029
    %v1032 = vadd.f32 %v1027, %v1030
    %v1033 = vmax.f32 %v1023, %v1032
    %v1034 = vlaneseq
    %v1035 = vshrl.u32 %v1034, 7
    %v1036 = vsub.s32 2, %v1035
    %v1037 = vrot.slane %v1010, %v1036
    %1038 = vset.pattern.permute.xlu0 2
    %1039 = vperm.xlu0 %1038, %v1013
    %v1040 = vpop.permute.xlu0 %1039
    %v1042 = vadd.f32 %v1037, %v1040
    %v1043 = vmax.f32 %v1033, %v1042
    %v1044 = vlaneseq
    %v1045 = vshrl.u32 %v1044, 7
    %v1046 = vsub.s32 3, %v1045
    %v1047 = vrot.slane %v1010, %v1046
    %1048 = vset.pattern.permute.xlu0 3
    %1049 = vperm.xlu0 %1048, %v1013
    %v1050 = vpop.permute.xlu0 %1049
    %v1052 = vadd.f32 %v1047, %v1050
    %v1053 = vmax.f32 %v1043, %v1052
    %v1054 = vlaneseq
    %v1055 = vshrl.u32 %v1054, 7
    %v1056 = vsub.s32 4, %v1055
    %v1057 = vrot.slane %v1010, %v1056
    %1058 = vset.pattern.permute.xlu0 4
    %1059 = vperm.xlu0 %1058, %v1013
    %v1060 = vpop.permute.xlu0 %1059
    %v1062 = vadd.f32 %v1057, %v1060
    %v1063 = vmax.f32 %v1053, %v1062
    %v1064 = vlaneseq
    %v1065 = vshrl.u32 %v1064, 7
    %v1066 = vsub.s32 5, %v1065
    %v1067 = vrot.slane %v1010, %v1066
    %1068 = vset.pattern.permute.xlu0 5
    %1069 = vperm.xlu0 %1068, %v1013
    %v1070 = vpop.permute.xlu0 %1069
    %v1072 = vadd.f32 %v1067, %v1070
    %v1073 = vmax.f32 %v1063, %v1072
    %v1074 = vlaneseq
    %v1075 = vshrl.u32 %v1074, 7
    %v1076 = vsub.s32 6, %v1075
    %v1077 = vrot.slane %v1010, %v1076
    %1078 = vset.pattern.permute.xlu0 6
    %1079 = vperm.xlu0 %1078, %v1013
    %v1080 = vpop.permute.xlu0 %1079
    %v1082 = vadd.f32 %v1077, %v1080
    %v1083 = vmax.f32 %v1073, %v1082
    %v1084 = vlaneseq
    %v1085 = vshrl.u32 %v1084, 7
    %v1086 = vsub.s32 7, %v1085
    %v1087 = vrot.slane %v1010, %v1086
    %1088 = vset.pattern.permute.xlu0 7
    %1089 = vperm.xlu0 %1088, %v1013
    %v1090 = vpop.permute.xlu0 %1089
    %v1092 = vadd.f32 %v1087, %v1090
    %v1093 = vmax.f32 %v1083, %v1092
    %1095 = vrot.lane.b32.xlu0 %v1002, 96
    %v1096 = vpop.permute.xlu0 %1095
    %v1099 = vsel %vm61, %v1093, 0
    %1101 = vmatprep.subr.mxu0 0.0
    %1102 = vmatpush1.msra.mxu0 %v926
    %1103 = vmatprep.subr.mxu0 0.0
    %1104 = vmatpush1.msra.mxu0 %v927
    %1105 = vmatprep.subr.mxu0 0.0
    %1106 = vmatpush1.msra.mxu0 %v928
    %1107 = vmatprep.subr.mxu0 0.0
    %1108 = vmatpush1.msra.mxu0 %v929
    %1109 = vmatprep.subr.mxu0 0.0
    %1110 = vmatpush1.msra.mxu0 0.0
    %1111 = vmatprep.subr.mxu0 0.0
    %1112 = vmatpush1.msra.mxu0 0.0
    %1113 = vmatprep.subr.mxu0 0.0
    %1114 = vmatpush1.msra.mxu0 0.0
    %1115 = vmatprep.subr.mxu0 0.0
    %1116 = vmatpush1.msra.mxu0 0.0
    %1117 = vmatprep.subr.mxu0 0.0
    %1118 = vmatpush1.msra.mxu0 0.0
    %1119 = vmatprep.subr.mxu0 0.0
    %1120 = vmatpush1.msra.mxu0 0.0
    %1121 = vmatprep.subr.mxu0 0.0
    %1122 = vmatpush1.msra.mxu0 0.0
    %1123 = vmatprep.subr.mxu0 0.0
    %1124 = vmatpush1.msra.mxu0 0.0
    %1125 = vmatprep.subr.mxu0 0.0
    %1126 = vmatpush1.msra.mxu0 0.0
    %1127 = vmatprep.subr.mxu0 0.0
    %1128 = vmatpush1.msra.mxu0 0.0
    %1129 = vmatprep.subr.mxu0 0.0
    %1130 = vmatpush1.msra.mxu0 0.0
    %1131 = vmatprep.subr.mxu0 0.0
    %1132 = vmatpush1.msra.mxu0 0.0
    %1133 = vmatprep.subr.mxu0 0.0
    %1134 = vmatpush1.msra.mxu0 0.0
    %1135 = vmatprep.subr.mxu0 0.0
    %1136 = vmatpush1.msra.mxu0 0.0
    %1137 = vmatprep.subr.mxu0 0.0
    %1138 = vmatpush1.msra.mxu0 0.0
    %1139 = vmatprep.subr.mxu0 0.0
    %1140 = vmatpush1.msra.mxu0 0.0
    %1141 = vmatprep.subr.mxu0 0.0
    %1142 = vmatpush1.msra.mxu0 0.0
    %1143 = vmatprep.subr.mxu0 0.0
    %1144 = vmatpush1.msra.mxu0 0.0
    %1145 = vmatprep.subr.mxu0 0.0
    %1146 = vmatpush1.msra.mxu0 0.0
    %1147 = vmatprep.subr.mxu0 0.0
    %1148 = vmatpush1.msra.mxu0 0.0
    %1149 = vmatprep.subr.mxu0 0.0
    %1150 = vmatpush1.msra.mxu0 0.0
    %1151 = vmatprep.subr.mxu0 0.0
    %1152 = vmatpush1.msra.mxu0 0.0
    %1153 = vmatprep.subr.mxu0 0.0
    %1154 = vmatpush1.msra.mxu0 0.0
    %1155 = vmatprep.subr.mxu0 0.0
    %1156 = vmatpush1.msra.mxu0 0.0
    %1157 = vmatprep.subr.mxu0 0.0
    %1158 = vmatpush1.msra.mxu0 0.0
    %1159 = vmatprep.subr.mxu0 0.0
    %1160 = vmatpush1.msra.mxu0 0.0
    %1161 = vmatprep.subr.mxu0 0.0
    %1162 = vmatpush1.msra.mxu0 0.0
    %1163 = vmatprep.subr.mxu0 0.0
    %1164 = vmatpush1.msra.mxu0 0.0
    %1165 = vmatprep.mubr.f32.mxu0 0.0
    %1166 = vmatmul.mubr.f32.gmra.mrb[0].mxu0 %v1099
    %v1167 = vpop.f32.mrb[0].mxu0
    %v1168 = vadd.f32 %v1096, %v1167
    %v1169 = vpop.f32.mrb[0].mxu0
    %1170 = vdwg.mxu0
    %v1171 = vmax.f32 %v1168, 0.0
    %v1172 = vlaneseq
    %v1173 = vshrl.u32 %v1172, 7
    %v1174 = vsub.s32 0, %v1173
    %v1175 = vrot.slane %v931, %v1174
    %v1176 = vmul.f32 %v1171, %v1175
    %v1177 = vsel %vm61, %v1176, 0.0
    %1178 = vadd.xlane.f32.xlu0 %v1177
    %v1179 = vpop.xlane.xlu0 %1178
    %v1180 = vmul.f32 %v1179, %v29
    %v1181 = vsel %vm36, %v1180, 0.0
    %v1182 = vrot.slane %v1181, 4
    %v1183 = vadd.f32 %v1181, %v1182
    %v1184 = vrot.slane %v1183, 2
    %v1185 = vadd.f32 %v1183, %v1184
    %v1186 = vrot.slane %v1185, 1
    %v1187 = vadd.f32 %v1185, %v1186
    %vm1188 = vcmp.gt.f32.partialorder %v1187, %v1179
    %vm1189 = vcmp.eq.f32.partialorder %v1187, %v1179
    %vm1190 = vmand %vm1189, %vm30
    %vm1191 = vmor %vm1188, %vm1190
    %v1192 = vsel %vm1191, 1, 0
    %v1193 = vcvt.s32.f32 %v1192
    %v1194 = vmul.f32 %v42, %v789
    %v1195 = vmul.f32 %v1194, %v1193
    %v1196 = vsel %vm36, %v1195, 0.0
    %1197 = vadd.xlane.f32.xlu0 %v1196
    %v1198 = vpop.xlane.xlu0 %1197
    %v1199 = vsel %vm328, %v876, 0.0
    %v1200 = vrot.slane %v1199, 4
    %v1201 = vadd.f32 %v1199, %v1200
    %v1202 = vrot.slane %v1201, 2
    %v1203 = vadd.f32 %v1201, %v1202
    %v1204 = vrot.slane %v1203, 1
    %v1205 = vadd.f32 %v1203, %v1204
    %v1206 = vmul.f32 %v1205, 0.8
    %v1207 = vceil.f32 %v1206
    %v1208 = vmul.f32 %v46, %v1207
    %v1209 = vsel %vm328, %v1208, 0.0
    %1210 = vadd.xlane.f32.xlu0 %v1209
    %v1211 = vpop.xlane.xlu0 %1210
    %vm1212 = vcmp.lt.f32.partialorder %v1198, %v1211
    %v1213 = vsel %vm1212, 1, 0
    %v1214 = vcvt.s32.f32 %v1213
    %v1215 = vmul.f32 %v781, %v1214
    %v1216 = vmul.f32 %v1215, %v29
    %v1217 = vsel %vm36, %v1216, 0.0
    %v1218 = vrot.slane %v1217, 4
    %v1219 = vadd.f32 %v1217, %v1218
    %v1220 = vrot.slane %v1219, 2
    %v1221 = vadd.f32 %v1219, %v1220
    %v1222 = vrot.slane %v1221, 1
    %v1223 = vadd.f32 %v1221, %v1222
    %v1224 = vtanh.pop %v1179
    %v1225 = vmul.f32 %v1171, %v1224
    %v1226 = vmul.f32 %v1225, %v1215
    %v1227 = vmul.f32 %v50, %v1223
    %v1228 = vsel %vm359, %v1227, 0.0
    %1229 = vadd.xlane.f32.xlu0 %v1228
    %v1230 = vpop.xlane.xlu0 %1229
    %v1232 = vsel %vm36, %v1227, 0
    %1234 = vmatprep.subr.mxu0 0.0
    %1235 = vmatpush1.msra.mxu0 %v1226
    %1236 = vmatprep.subr.mxu0 0.0
    %1237 = vmatpush1.msra.mxu0 0.0
    %1238 = vmatprep.subr.mxu0 0.0
    %1239 = vmatpush1.msra.mxu0 0.0
    %1240 = vmatprep.subr.mxu0 0.0
    %1241 = vmatpush1.msra.mxu0 0.0
    %1242 = vmatprep.subr.mxu0 0.0
    %1243 = vmatpush1.msra.mxu0 0.0
    %1244 = vmatprep.subr.mxu0 0.0
    %1245 = vmatpush1.msra.mxu0 0.0
    %1246 = vmatprep.subr.mxu0 0.0
    %1247 = vmatpush1.msra.mxu0 0.0
    %1248 = vmatprep.subr.mxu0 0.0
    %1249 = vmatpush1.msra.mxu0 0.0
    %1250 = vmatprep.subr.mxu0 0.0
    %1251 = vmatpush1.msra.mxu0 0.0
    %1252 = vmatprep.subr.mxu0 0.0
    %1253 = vmatpush1.msra.mxu0 0.0
    %1254 = vmatprep.subr.mxu0 0.0
    %1255 = vmatpush1.msra.mxu0 0.0
    %1256 = vmatprep.subr.mxu0 0.0
    %1257 = vmatpush1.msra.mxu0 0.0
    %1258 = vmatprep.subr.mxu0 0.0
    %1259 = vmatpush1.msra.mxu0 0.0
    %1260 = vmatprep.subr.mxu0 0.0
    %1261 = vmatpush1.msra.mxu0 0.0
    %1262 = vmatprep.subr.mxu0 0.0
    %1263 = vmatpush1.msra.mxu0 0.0
    %1264 = vmatprep.subr.mxu0 0.0
    %1265 = vmatpush1.msra.mxu0 0.0
    %1266 = vmatprep.subr.mxu0 0.0
    %1267 = vmatpush1.msra.mxu0 0.0
    %1268 = vmatprep.subr.mxu0 0.0
    %1269 = vmatpush1.msra.mxu0 0.0
    %1270 = vmatprep.subr.mxu0 0.0
    %1271 = vmatpush1.msra.mxu0 0.0
    %1272 = vmatprep.subr.mxu0 0.0
    %1273 = vmatpush1.msra.mxu0 0.0
    %1274 = vmatprep.subr.mxu0 0.0
    %1275 = vmatpush1.msra.mxu0 0.0
    %1276 = vmatprep.subr.mxu0 0.0
    %1277 = vmatpush1.msra.mxu0 0.0
    %1278 = vmatprep.subr.mxu0 0.0
    %1279 = vmatpush1.msra.mxu0 0.0
    %1280 = vmatprep.subr.mxu0 0.0
    %1281 = vmatpush1.msra.mxu0 0.0
    %1282 = vmatprep.subr.mxu0 0.0
    %1283 = vmatpush1.msra.mxu0 0.0
    %1284 = vmatprep.subr.mxu0 0.0
    %1285 = vmatpush1.msra.mxu0 0.0
    %1286 = vmatprep.subr.mxu0 0.0
    %1287 = vmatpush1.msra.mxu0 0.0
    %1288 = vmatprep.subr.mxu0 0.0
    %1289 = vmatpush1.msra.mxu0 0.0
    %1290 = vmatprep.subr.mxu0 0.0
    %1291 = vmatpush1.msra.mxu0 0.0
    %1292 = vmatprep.subr.mxu0 0.0
    %1293 = vmatpush1.msra.mxu0 0.0
    %1294 = vmatprep.subr.mxu0 0.0
    %1295 = vmatpush1.msra.mxu0 0.0
    %1296 = vmatprep.subr.mxu0 0.0
    %1297 = vmatpush1.msra.mxu0 0.0
    %1298 = vmatprep.mubr.f32.mxu0 0.0
    %1299 = vmatmul.mubr.f32.gmra.mrb[0].mxu0 %v1232
    %v1300 = vpop.f32.mrb[0].mxu0
    %v1301 = vadd.f32 0.0, %v1300
    %v1302 = vpop.f32.mrb[0].mxu0
    %1303 = vdwg.mxu0
    %v1304 = vmax.f32 %v1230, 1.0
    %v1305 = vrcp.pop %v1304
    %v1306 = vmul.f32 %v1301, %v1305
    %v1307 = vadd.f32 %v875, %v1306
    %v1308 = vmul.f32 %v46, %v1215
    %v1309 = vsub.f32 %v1308, 1.0
    %v1310 = vmul.f32 %v1309, 1e+30
    %1312 = vset.pattern.permute.xlu0 0
    %1313 = vperm.xlu0 %1312, %v1310
    %v1314 = vpop.permute.xlu0 %1313
    %v1316 = vadd.f32 %v1226, %v1314
    %v1317 = vsel %vm61, %v1316, -inf
    %v1318 = vrot.slane %v1317, 4
    %v1319 = vmax.f32 %v1317, %v1318
    %v1320 = vrot.slane %v1319, 2
    %v1321 = vmax.f32 %v1319, %v1320
    %v1322 = vrot.slane %v1321, 1
    %v1323 = vmax.f32 %v1321, %v1322
    %vm1324 = vcmp.gt.f32.partialorder %v1230, 0.0
    %v1325 = vsel %vm1324, 1, 0
    %vm1326 = vcmp.eq.s32.totalorder %v1325, 1
    %v1327 = vsel %vm1326, %v1323, 0.0
    %v1328 = vlaneseq
    %v1329 = vshrl.u32 %v1328, 7
    %v1330 = vsub.s32 0, %v1329
    %v1331 = vrot.slane %v1327, %v1330
    %v1332 = vsel %vm460, %v1331, 0.0
    %v1333 = vadd.f32 %v920, %v1332
    %1334 = vset.pattern.permute.xlu0 1
    %1335 = vperm.xlu0 %1334, %v1310
    %v1336 = vpop.permute.xlu0 %1335
    %v1338 = vadd.f32 %v1226, %v1336
    %v1339 = vsel %vm61, %v1338, -inf
    %v1340 = vrot.slane %v1339, 4
    %v1341 = vmax.f32 %v1339, %v1340
    %v1342 = vrot.slane %v1341, 2
    %v1343 = vmax.f32 %v1341, %v1342
    %v1344 = vrot.slane %v1343, 1
    %v1345 = vmax.f32 %v1343, %v1344
    %v1346 = vsel %vm1326, %v1345, 0.0
    %v1347 = vlaneseq
    %v1348 = vshrl.u32 %v1347, 7
    %v1349 = vsub.s32 1, %v1348
    %v1350 = vrot.slane %v1346, %v1349
    %v1351 = vsel %vm480, %v1350, 0.0
    %v1352 = vadd.f32 %v1333, %v1351
    %vm1353 = vcmask 254976
    %1354 = vst.msk [vmem:[#allocation2] sm:$0x3] %vm1353, %v1352
    %1356 = vrot.lane.b32.xlu0 %v1307, 32
    %v1357 = vpop.permute.xlu0 %1356
    %vm1359 = vcmask 517376
    %1360 = vst.msk [vmem:[#allocation2] sm:$0x3] %vm1359, %v1357
    %v1361 = vld [vmem:[#allocation2] sm:$0x3]
    %v1362 = vld [vmem:[%s3] sm:$0xff]
    %v1363 = vld [vmem:[%s3 + $0x8] sm:$0xff]
    %v1364 = vld [vmem:[%s3 + $0x10] sm:$0xff]
    %v1365 = vld [vmem:[%s3 + $0x18] sm:$0xff]
    %v1366 = vld [vmem:[%s3 + $0x20] sm:$0xff]
    %v1367 = vld [vmem:[%s3 + $0x28] sm:$0xff]
    %v1368 = vld [vmem:[%s3 + $0x30] sm:$0xff]
    %v1369 = vld [vmem:[%s3 + $0x38] sm:$0xff]
    %v1370 = vld [vmem:[%s3 + $0x40] sm:$0x1]
    %v1371 = vld [vmem:[%s3 + $0x48] sm:$0xff]
    %v1372 = vld [vmem:[%s3 + $0x50] sm:$0xff]
    %v1373 = vld [vmem:[%s3 + $0x58] sm:$0xff]
    %v1374 = vld [vmem:[%s3 + $0x60] sm:$0xff]
    %v1375 = vld [vmem:[%s3 + $0x68] sm:$0x1]
    %v1376 = vld [vmem:[%s3 + $0x70] sm:$0x1]
    %v1377 = vld [vmem:[%s3 + $0x78] sm:$0x1]
    %v1378 = vlaneseq
    %v1379 = vshrl.u32 %v1378, 7
    %v1380 = vsub.s32 0, %v1379
    %v1381 = vrot.slane %v1370, %v1380
    %vm1382 = vcmask 523264
    %v1384 = vsel %vm1382, %v1361, 0
    %1386 = vmatprep.subr.mxu0 0.0
    %1387 = vmatpush1.msra.mxu0 %v1362
    %1388 = vmatprep.subr.mxu0 0.0
    %1389 = vmatpush1.msra.mxu0 %v1363
    %1390 = vmatprep.subr.mxu0 0.0
    %1391 = vmatpush1.msra.mxu0 %v1364
    %1392 = vmatprep.subr.mxu0 0.0
    %1393 = vmatpush1.msra.mxu0 %v1365
    %1394 = vmatprep.subr.mxu0 0.0
    %1395 = vmatpush1.msra.mxu0 %v1366
    %1396 = vmatprep.subr.mxu0 0.0
    %1397 = vmatpush1.msra.mxu0 %v1367
    %1398 = vmatprep.subr.mxu0 0.0
    %1399 = vmatpush1.msra.mxu0 %v1368
    %1400 = vmatprep.subr.mxu0 0.0
    %1401 = vmatpush1.msra.mxu0 %v1369
    %1402 = vmatprep.subr.mxu0 0.0
    %1403 = vmatpush1.msra.mxu0 0.0
    %1404 = vmatprep.subr.mxu0 0.0
    %1405 = vmatpush1.msra.mxu0 0.0
    %1406 = vmatprep.subr.mxu0 0.0
    %1407 = vmatpush1.msra.mxu0 0.0
    %1408 = vmatprep.subr.mxu0 0.0
    %1409 = vmatpush1.msra.mxu0 0.0
    %1410 = vmatprep.subr.mxu0 0.0
    %1411 = vmatpush1.msra.mxu0 0.0
    %1412 = vmatprep.subr.mxu0 0.0
    %1413 = vmatpush1.msra.mxu0 0.0
    %1414 = vmatprep.subr.mxu0 0.0
    %1415 = vmatpush1.msra.mxu0 0.0
    %1416 = vmatprep.subr.mxu0 0.0
    %1417 = vmatpush1.msra.mxu0 0.0
    %1418 = vmatprep.subr.mxu0 0.0
    %1419 = vmatpush1.msra.mxu0 0.0
    %1420 = vmatprep.subr.mxu0 0.0
    %1421 = vmatpush1.msra.mxu0 0.0
    %1422 = vmatprep.subr.mxu0 0.0
    %1423 = vmatpush1.msra.mxu0 0.0
    %1424 = vmatprep.subr.mxu0 0.0
    %1425 = vmatpush1.msra.mxu0 0.0
    %1426 = vmatprep.subr.mxu0 0.0
    %1427 = vmatpush1.msra.mxu0 0.0
    %1428 = vmatprep.subr.mxu0 0.0
    %1429 = vmatpush1.msra.mxu0 0.0
    %1430 = vmatprep.subr.mxu0 0.0
    %1431 = vmatpush1.msra.mxu0 0.0
    %1432 = vmatprep.subr.mxu0 0.0
    %1433 = vmatpush1.msra.mxu0 0.0
    %1434 = vmatprep.subr.mxu0 0.0
    %1435 = vmatpush1.msra.mxu0 0.0
    %1436 = vmatprep.subr.mxu0 0.0
    %1437 = vmatpush1.msra.mxu0 0.0
    %1438 = vmatprep.subr.mxu0 0.0
    %1439 = vmatpush1.msra.mxu0 0.0
    %1440 = vmatprep.subr.mxu0 0.0
    %1441 = vmatpush1.msra.mxu0 0.0
    %1442 = vmatprep.subr.mxu0 0.0
    %1443 = vmatpush1.msra.mxu0 0.0
    %1444 = vmatprep.subr.mxu0 0.0
    %1445 = vmatpush1.msra.mxu0 0.0
    %1446 = vmatprep.subr.mxu0 0.0
    %1447 = vmatpush1.msra.mxu0 0.0
    %1448 = vmatprep.subr.mxu0 0.0
    %1449 = vmatpush1.msra.mxu0 0.0
    %1450 = vmatprep.mubr.f32.mxu0 0.0
    %1451 = vmatmul.mubr.f32.gmra.mrb[0].mxu0 %v1384
    %v1452 = vpop.f32.mrb[0].mxu0
    %v1453 = vadd.f32 %v1381, %v1452
    %v1454 = vpop.f32.mrb[0].mxu0
    %1455 = vdwg.mxu0
    %v1456 = vmax.f32 %v1453, 0.0
    %v1457 = vlaneseq
    %v1458 = vshrl.u32 %v1457, 7
    %v1459 = vsub.s32 0, %v1458
    %v1460 = vrot.slane %v1375, %v1459
    %v1462 = vsel %vm61, %v1456, 0
    %1464 = vmatprep.subr.mxu0 0.0
    %1465 = vmatpush1.msra.mxu0 %v1371
    %1466 = vmatprep.subr.mxu0 0.0
    %1467 = vmatpush1.msra.mxu0 %v1372
    %1468 = vmatprep.subr.mxu0 0.0
    %1469 = vmatpush1.msra.mxu0 %v1373
    %1470 = vmatprep.subr.mxu0 0.0
    %1471 = vmatpush1.msra.mxu0 %v1374
    %1472 = vmatprep.subr.mxu0 0.0
    %1473 = vmatpush1.msra.mxu0 0.0
    %1474 = vmatprep.subr.mxu0 0.0
    %1475 = vmatpush1.msra.mxu0 0.0
    %1476 = vmatprep.subr.mxu0 0.0
    %1477 = vmatpush1.msra.mxu0 0.0
    %1478 = vmatprep.subr.mxu0 0.0
    %1479 = vmatpush1.msra.mxu0 0.0
    %1480 = vmatprep.subr.mxu0 0.0
    %1481 = vmatpush1.msra.mxu0 0.0
    %1482 = vmatprep.subr.mxu0 0.0
    %1483 = vmatpush1.msra.mxu0 0.0
    %1484 = vmatprep.subr.mxu0 0.0
    %1485 = vmatpush1.msra.mxu0 0.0
    %1486 = vmatprep.subr.mxu0 0.0
    %1487 = vmatpush1.msra.mxu0 0.0
    %1488 = vmatprep.subr.mxu0 0.0
    %1489 = vmatpush1.msra.mxu0 0.0
    %1490 = vmatprep.subr.mxu0 0.0
    %1491 = vmatpush1.msra.mxu0 0.0
    %1492 = vmatprep.subr.mxu0 0.0
    %1493 = vmatpush1.msra.mxu0 0.0
    %1494 = vmatprep.subr.mxu0 0.0
    %1495 = vmatpush1.msra.mxu0 0.0
    %1496 = vmatprep.subr.mxu0 0.0
    %1497 = vmatpush1.msra.mxu0 0.0
    %1498 = vmatprep.subr.mxu0 0.0
    %1499 = vmatpush1.msra.mxu0 0.0
    %1500 = vmatprep.subr.mxu0 0.0
    %1501 = vmatpush1.msra.mxu0 0.0
    %1502 = vmatprep.subr.mxu0 0.0
    %1503 = vmatpush1.msra.mxu0 0.0
    %1504 = vmatprep.subr.mxu0 0.0
    %1505 = vmatpush1.msra.mxu0 0.0
    %1506 = vmatprep.subr.mxu0 0.0
    %1507 = vmatpush1.msra.mxu0 0.0
    %1508 = vmatprep.subr.mxu0 0.0
    %1509 = vmatpush1.msra.mxu0 0.0
    %1510 = vmatprep.subr.mxu0 0.0
    %1511 = vmatpush1.msra.mxu0 0.0
    %1512 = vmatprep.subr.mxu0 0.0
    %1513 = vmatpush1.msra.mxu0 0.0
    %1514 = vmatprep.subr.mxu0 0.0
    %1515 = vmatpush1.msra.mxu0 0.0
    %1516 = vmatprep.subr.mxu0 0.0
    %1517 = vmatpush1.msra.mxu0 0.0
    %1518 = vmatprep.subr.mxu0 0.0
    %1519 = vmatpush1.msra.mxu0 0.0
    %1520 = vmatprep.subr.mxu0 0.0
    %1521 = vmatpush1.msra.mxu0 0.0
    %1522 = vmatprep.subr.mxu0 0.0
    %1523 = vmatpush1.msra.mxu0 0.0
    %1524 = vmatprep.subr.mxu0 0.0
    %1525 = vmatpush1.msra.mxu0 0.0
    %1526 = vmatprep.subr.mxu0 0.0
    %1527 = vmatpush1.msra.mxu0 0.0
    %1528 = vmatprep.mubr.f32.mxu0 0.0
    %1529 = vmatmul.mubr.f32.gmra.mrb[0].mxu0 %v1462
    %v1530 = vpop.f32.mrb[0].mxu0
    %v1531 = vadd.f32 %v1460, %v1530
    %v1532 = vpop.f32.mrb[0].mxu0
    %1533 = vdwg.mxu0
    %v1534 = vmax.f32 %v1531, 0.0
    %v1535 = vlaneseq
    %v1536 = vshrl.u32 %v1535, 7
    %v1537 = vsub.s32 0, %v1536
    %v1538 = vrot.slane %v1376, %v1537
    %v1539 = vmul.f32 %v1534, %v1538
    %vm1540 = vcmask 123904
    %v1541 = vsel %vm1540, %v1539, 0.0
    %1542 = vadd.xlane.f32.xlu0 %v1541
    %v1543 = vpop.xlane.xlu0 %1542
    %v1544 = vlaneseq
    %v1545 = vshrl.u32 %v1544, 7
    %v1546 = vsub.s32 0, %v1545
    %v1547 = vrot.slane %v1377, %v1546
    %v1548 = vadd.f32 %v1543, %v1547
    %v1549 = vxor.u32 %v1548, 2147483648
    %v1550 = vmul.f32 %v1549, 1.442695
    %v1551 = vpow.pop %v1550
    %v1552 = vadd.f32 %v1551, 1.0
    %v1553 = vrcp.pop %v1552
    %v1554 = vmul.f32 1.0, %v1553
    %vm1555 = vcmask 1024
    %1556 = vst.msk [vmem:[%s5] sm:$0x3] %vm1555, %v1554
    // Predicated region
    $region18: #{net_forward.1} parent=1 // pred_check
      _
    $region19: #{net_forward.1} parent=1 // pred_check_branch
      %1558 = sbr.rel (0) target = $region21
    $region20: #{net_forward.1} parent=1 // pred_region
      %s1560 = ssub.s32 32, 32
      %1561 = vsyncadd [#allocation3], %s1560
      %s1563 = sshll.u32 [#allocation2], 4
      %s1564 = int_to_ptr.vmem [resolvable:$true] %s1563
      %1566 = dma.vmem_to_hbm [thread:$0]  %s1564, 32, %s4, [#allocation3]
    $region21: #{net_forward.1} parent=1 // pred_fallthru
      _
    // Predicated region
    $region22: #{net_forward.1} parent=1 // pred_check
      _
    $region23: #{net_forward.1} parent=1 // pred_check_branch
      %1568 = sbr.rel (0) target = $region25
    $region24: #{net_forward.1} parent=1 // pred_region
      _
    $region25: #{net_forward.1} parent=1 // pred_fallthru
      _
    // Predicated region
    $region26: #{net_forward.1} parent=1 // pred_check
      _
    $region27: #{net_forward.1} parent=1 // pred_check_branch
      %1570 = sbr.rel (0) target = $region29
    $region28: #{net_forward.1} parent=1 // pred_region
      %1571 = dma.done [#allocation3], 32
    $region29: #{net_forward.1} parent=1 // pred_fallthru
      _
    // Predicated region
    $region30: #{net_forward.1} parent=1 // pred_check
      _
    $region31: #{net_forward.1} parent=1 // pred_check_branch
      %1573 = sbr.rel (0) target = $region33
    $region32: #{net_forward.1} parent=1 // pred_region
      _
    $region33: #{net_forward.1} parent=1 // pred_fallthru
      _
    %1574 = vsyncpa [#allocation3], 1

</llo_original>
